<compile_context>
chip_gen: v7x
topology: tpu7x:2x2x1
jax: 0.10.0
libtpu: 0.0.40
codegen_flags: <defaults>
</compile_context>

<pallas_src>
import functools

import jax
import jax.numpy as jnp
from jax.experimental import pallas as pl
from jax.experimental.pallas import tpu as pltpu

_LANE = 128
_SUBLANE = 8


def _round_up(x, m):
    return ((x + m - 1) // m) * m


def _pad2d(x, rows, cols):
    return jnp.pad(x, ((0, rows - x.shape[0]), (0, cols - x.shape[1])))


def _pick_tile(n_p):
    # Prefer large row tiles (>=512) to amortize per-grid-step overhead; n_p is
    # always a multiple of 128 so 128 is a guaranteed fallback.
    for t in (512, 256, 128):
        if n_p % t == 0:
            return t
    return 128


def _gcn_kernel(a_ref, x_ref, w1_ref, b1_ref, w2_ref, b2_ref,
                pool_ref, meta_ref, wm_ref, bm_ref,
                wf1_ref, wf2_ref, bf_ref, out_ref,
                xw1_ref, hw2_ref, pooled_ref):
    """Two-phase row-tiled GCN forward.

    grid = (phase, row_tile):
      phase 0: (first step) XW1 = X @ W1 -> scratch, zero pooled; per tile
               H1 = ReLU(A[i] @ XW1 + b1), HW2[i] = H1 @ W2 -> scratch.
      phase 1: per tile H2 = ReLU(A[i] @ HW2 + b2),
               pooled += pool[:, i] @ H2;
               on the last tile: metadata MLP + fc epilogue -> out.
    Matmul operands are bf16 (MXU); accumulation, bias and ReLU are f32.
    The mean-pool matrix stays f32 for accuracy (tiny B_p rows).
    """
    phase = pl.program_id(0)
    i = pl.program_id(1)
    n_tiles = pl.num_programs(1)
    tile_n = a_ref.shape[0]

    @pl.when((phase == 0) & (i == 0))
    def _():
        xw1_ref[...] = jnp.dot(
            x_ref[...], w1_ref[...],
            preferred_element_type=jnp.float32).astype(jnp.bfloat16)
        pooled_ref[...] = jnp.zeros_like(pooled_ref)

    a_tile = a_ref[...]                                      # bf16 (tile, Np)

    @pl.when(phase == 0)
    def _():
        # GCNConv 1 row tile: ReLU(A[i] @ (X W1) + b1), then project by W2.
        h1 = jnp.dot(a_tile, xw1_ref[...],
                     preferred_element_type=jnp.float32) + b1_ref[...]
        h1 = jnp.maximum(h1, 0.0)
        row0 = pl.multiple_of(i * tile_n, tile_n)
        hw2_ref[pl.ds(row0, tile_n), :] = jnp.dot(
            h1.astype(jnp.bfloat16), w2_ref[...],
            preferred_element_type=jnp.float32).astype(jnp.bfloat16)

    @pl.when(phase == 1)
    def _():
        # GCNConv 2 row tile + mean-pool accumulation (pool columns of this
        # row tile only).
        h2 = jnp.dot(a_tile, hw2_ref[...],
                     preferred_element_type=jnp.float32) + b2_ref[...]
        h2 = jnp.maximum(h2, 0.0)
        pooled_ref[...] += jnp.dot(pool_ref[...], h2,
                                   preferred_element_type=jnp.float32)

    @pl.when((phase == 1) & (i == n_tiles - 1))
    def _():
        # Epilogue: metadata MLP (Linear + ReLU; Dropout == identity) and fc on
        # concat([pooled, m]) written as two matmuls (no in-kernel concat).
        m = jnp.dot(meta_ref[...], wm_ref[...],
                    preferred_element_type=jnp.float32) + bm_ref[...]
        m = jnp.maximum(m, 0.0)
        out_ref[...] = (
            jnp.dot(pooled_ref[...].astype(jnp.bfloat16), wf1_ref[...],
                    preferred_element_type=jnp.float32)
            + jnp.dot(m.astype(jnp.bfloat16), wf2_ref[...],
                      preferred_element_type=jnp.float32)
            + bf_ref[...])


def init_params(key, input_dim, hidden_dim, output_dim, metadata_dim):
    ks = jax.random.split(key, 8)

    def lin(kw, kb, fan_in, fan_out):
        bound = 1.0 / jnp.sqrt(jnp.float32(fan_in))
        w = jax.random.uniform(kw, (fan_in, fan_out), jnp.float32, -bound, bound)
        b = jax.random.uniform(kb, (1, fan_out), jnp.float32, -bound, bound)
        return w, b

    w1, b1 = lin(ks[0], ks[1], input_dim, hidden_dim)        # conv1
    w2, b2 = lin(ks[2], ks[3], hidden_dim, hidden_dim)       # conv2
    wm, bm = lin(ks[4], ks[5], metadata_dim, hidden_dim)     # metadata_mlp
    wf, bf = lin(ks[6], ks[7], 2 * hidden_dim, output_dim)   # fc
    return dict(w1=w1, b1=b1, w2=w2, b2=b2, wm=wm, bm=bm,
                wf1=wf[:hidden_dim], wf2=wf[hidden_dim:], bf=bf)


@functools.partial(jax.jit, static_argnames=("num_graphs", "metadata_dim"))
def gcn_forward(params, x, edge_index, edge_attr, batch, metadata,
                num_graphs, metadata_dim=30):
    num_nodes, input_dim = x.shape
    hidden_dim = params["w1"].shape[1]
    output_dim = params["bf"].shape[1]

    # Lane/sublane-friendly padded sizes (zero padding is exact; see notes).
    n_p = _round_up(num_nodes, _LANE)
    b_p = _round_up(num_graphs, _SUBLANE)
    f_p = _round_up(input_dim, _LANE)
    h_p = _round_up(hidden_dim, _LANE)
    m_p = _round_up(metadata_dim, _LANE)
    o_p = _round_up(output_dim, _LANE)
    bf16 = jnp.bfloat16

    # --- graph-structure tensors built on device, directly at padded shape.
    # Scatter + symmetric-normalize + bf16 cast are fused (one scatter pass,
    # one reduce, one elementwise pass); padded rows have dinv = 0 so the
    # padding is exact.
    # TODO(synk): if the graph topology / batch vector is static across steps,
    # hoist a_pad / pool_pad / first_idx out of the per-call jit and pass them
    # in pre-built to avoid rebuilding the O(N^2) scatter every forward.
    loop = jnp.arange(num_nodes, dtype=edge_index.dtype)
    src = jnp.concatenate([edge_index[0], loop])
    dst = jnp.concatenate([edge_index[1], loop])
    w = jnp.concatenate([edge_attr.astype(jnp.float32).reshape(-1),
                         jnp.ones((num_nodes,), jnp.float32)])
    adj = jnp.zeros((n_p, n_p), jnp.float32).at[dst, src].add(w)
    deg = adj.sum(axis=1)
    dinv = jnp.where(deg > 0, jax.lax.rsqrt(deg), 0.0)
    a_pad = (dinv[:, None] * adj * dinv[None, :]).astype(bf16)

    # global_mean_pool as a (B_p, N_p) f32 matrix built at padded shape:
    # padded node columns (batch id -1) never match, padded graph rows stay 0.
    batch_pad = jnp.full((n_p,), -1, dtype=batch.dtype).at[:num_nodes].set(batch)
    onehot = (batch_pad[None, :] ==
              jnp.arange(b_p, dtype=batch.dtype)[:, None])       # (B_p, N_p)
    counts = jnp.maximum(onehot.sum(axis=1, keepdims=True).astype(jnp.float32),
                         1.0)
    pool_pad = onehot.astype(jnp.float32) / counts                # f32, exact

    # First node index of each graph (replaces the torch Python loop).  Graphs
    # with zero nodes get node 0's metadata rather than being skipped (the
    # torch loop would drop the row and shapes would mismatch at the concat).
    first_idx = jnp.argmax(onehot, axis=1)[:num_graphs].astype(jnp.int32)
    if metadata.ndim == 1:
        if metadata.shape[0] == metadata_dim:
            meta_b = jnp.broadcast_to(metadata[None, :].astype(jnp.float32),
                                      (num_graphs, metadata_dim))
        else:
            meta_b = jnp.zeros((num_graphs, metadata_dim), jnp.float32)
    else:
        if metadata.shape[1] == metadata_dim:
            meta_b = jnp.take(metadata.astype(jnp.float32),
                              first_idx % metadata.shape[0], axis=0)
        else:
            meta_b = jnp.zeros((num_graphs, metadata_dim), jnp.float32)

    # --- pad + cast fused; bf16 matmul operands, f32 biases.
    x_pad = _pad2d(x.astype(jnp.float32), n_p, f_p).astype(bf16)
    meta_pad = _pad2d(meta_b, b_p, m_p).astype(bf16)
    w1 = _pad2d(params["w1"], f_p, h_p).astype(bf16)
    w2 = _pad2d(params["w2"], h_p, h_p).astype(bf16)
    wm = _pad2d(params["wm"], m_p, h_p).astype(bf16)
    wf1 = _pad2d(params["wf1"], h_p, o_p).astype(bf16)
    wf2 = _pad2d(params["wf2"], h_p, o_p).astype(bf16)
    b1 = _pad2d(params["b1"].astype(jnp.float32), 1, h_p)
    b2 = _pad2d(params["b2"].astype(jnp.float32), 1, h_p)
    bm = _pad2d(params["bm"].astype(jnp.float32), 1, h_p)
    bfc = _pad2d(params["bf"].astype(jnp.float32), 1, o_p)

    tile_n = _pick_tile(n_p)
    n_tiles = n_p // tile_n
    grid = (2, n_tiles)          # (phase, row tile)

    in_specs = [
        pl.BlockSpec((tile_n, n_p), lambda p, i: (i, 0)),    # A_hat row tiles
        pl.BlockSpec((n_p, f_p), lambda p, i: (0, 0)),        # X (resident)
        pl.BlockSpec((f_p, h_p), lambda p, i: (0, 0)),        # W1
        pl.BlockSpec((1, h_p), lambda p, i: (0, 0)),          # b1
        pl.BlockSpec((h_p, h_p), lambda p, i: (0, 0)),        # W2
        pl.BlockSpec((1, h_p), lambda p, i: (0, 0)),          # b2
        pl.BlockSpec((b_p, tile_n), lambda p, i: (0, i)),     # pool col tiles
        pl.BlockSpec((b_p, m_p), lambda p, i: (0, 0)),        # metadata
        pl.BlockSpec((m_p, h_p), lambda p, i: (0, 0)),        # Wm
        pl.BlockSpec((1, h_p), lambda p, i: (0, 0)),          # bm
        pl.BlockSpec((h_p, o_p), lambda p, i: (0, 0)),        # Wf top half
        pl.BlockSpec((h_p, o_p), lambda p, i: (0, 0)),        # Wf bottom half
        pl.BlockSpec((1, o_p), lambda p, i: (0, 0)),          # bf
    ]
    out_specs = pl.BlockSpec((b_p, o_p), lambda p, i: (0, 0))
    scratch_shapes = [
        pltpu.VMEM((n_p, h_p), bf16),         # X @ W1
        pltpu.VMEM((n_p, h_p), bf16),         # ReLU(A @ XW1 + b1) @ W2
        pltpu.VMEM((b_p, h_p), jnp.float32),  # pooled accumulator
    ]

    # Explicit VMEM budget (default double-buffering on every input) so the
    # compiler is not limited by the default scoped VMEM limit.
    buf = 2
    footprint = (
        buf * tile_n * n_p * 2 + buf * b_p * tile_n * 4 + buf * n_p * f_p * 2
        + buf * (f_p * h_p + h_p * h_p + m_p * h_p + 2 * h_p * o_p) * 2
        + buf * b_p * m_p * 2 + buf * 8 * (3 * h_p + o_p) * 4
        + buf * b_p * o_p * 4
        + 2 * n_p * h_p * 2 + b_p * h_p * 4)
    vmem_limit = int(min(64 * 2 ** 20, max(32 * 2 ** 20, footprint * 3 // 2)))

    flops = 2 * (n_p * f_p * h_p + 2 * n_p * n_p * h_p + n_p * h_p * h_p
                 + b_p * n_p * h_p + b_p * m_p * h_p + 2 * b_p * h_p * o_p)
    bytes_accessed = (4 * n_p * n_p + 2 * n_p * f_p + 8 * b_p * n_p
                      + 2 * (f_p * h_p + h_p * h_p + m_p * h_p + 2 * h_p * o_p)
                      + 2 * b_p * m_p + 4 * (3 * h_p + o_p) + 4 * b_p * o_p)

    inputs = (a_pad, x_pad, w1, b1, w2, b2, pool_pad, meta_pad, wm, bm,
              wf1, wf2, bfc)

    out = pl.pallas_call(
        _gcn_kernel,
        out_shape=jax.ShapeDtypeStruct((b_p, o_p), jnp.float32),
        grid_spec=pltpu.PrefetchScalarGridSpec(
            num_scalar_prefetch=0, grid=grid,
            in_specs=in_specs, out_specs=out_specs,
            scratch_shapes=scratch_shapes),
        compiler_params=pltpu.CompilerParams(
            # Both axes carry dependencies through the persistent VMEM
            # scratches (XW1 / HW2 / pooled), so both stay "arbitrary".
            # TODO(synk): on v7x (2 TCs/chip) split each phase's row tiles
            # across cores with core_map + a cross-core reduction of `pooled`.
            dimension_semantics=("arbitrary", "arbitrary"),
            vmem_limit_bytes=vmem_limit),
        cost_estimate=pl.CostEstimate(flops=flops, transcendentals=0,
                                      bytes_accessed=bytes_accessed),
    )(*inputs)
    return out[:num_graphs, :output_dim]


if __name__ == "__main__":
    key = jax.random.PRNGKey(0)

    # Small problem: B=2 graphs, 8 nodes each (N=16), node feature dim 16,
    # hidden 32, metadata dim 30, output dim 2 (e.g. ADHD + sex heads).
    num_graphs = 2
    nodes_per_graph = 8
    num_nodes = num_graphs * nodes_per_graph
    input_dim = 16
    hidden_dim = 32
    metadata_dim = 30
    output_dim = 2
    num_edges = 40

    k_x, k_ei, k_ea, k_meta, k_par = jax.random.split(key, 5)

    x = jax.random.normal(k_x, (num_nodes, input_dim), jnp.float32)

    # Edges kept within each graph (block-diagonal, like a PyG batched graph).
    graph_of_edge = jax.random.randint(k_ei, (num_edges,), 0, num_graphs)
    k_s, k_d = jax.random.split(k_ei)
    src = jax.random.randint(k_s, (num_edges,), 0, nodes_per_graph)
    dst = jax.random.randint(k_d, (num_edges,), 0, nodes_per_graph)
    edge_index = jnp.stack([src + graph_of_edge * nodes_per_graph,
                            dst + graph_of_edge * nodes_per_graph]).astype(jnp.int32)
    edge_attr = jax.random.uniform(k_ea, (num_edges,), jnp.float32, 0.1, 1.0)

    batch = jnp.repeat(jnp.arange(num_graphs, dtype=jnp.int32), nodes_per_graph)
    metadata = jax.random.normal(k_meta, (num_nodes, metadata_dim), jnp.float32)

    params = init_params(k_par, input_dim, hidden_dim, output_dim, metadata_dim)

    out = gcn_forward(params, x, edge_index, edge_attr, batch, metadata,
                      num_graphs, metadata_dim)
    jax.block_until_ready(out)
    assert out.shape == (num_graphs, output_dim)
    print("KERNEL_OK")
</pallas_src>

<mosaic_0001>
module attributes {stable_mosaic.version = 11 : i64} {
  func.func @_gcn_kernel(%arg0: i32, %arg1: i32, %arg2: memref<128x128xbf16, #tpu.memory_space<vmem>>, %arg3: memref<128x128xbf16, #tpu.memory_space<vmem>>, %arg4: memref<128x128xbf16, #tpu.memory_space<vmem>>, %arg5: memref<1x128xf32, #tpu.memory_space<vmem>>, %arg6: memref<128x128xbf16, #tpu.memory_space<vmem>>, %arg7: memref<1x128xf32, #tpu.memory_space<vmem>>, %arg8: memref<8x128xf32, #tpu.memory_space<vmem>>, %arg9: memref<8x128xbf16, #tpu.memory_space<vmem>>, %arg10: memref<128x128xbf16, #tpu.memory_space<vmem>>, %arg11: memref<1x128xf32, #tpu.memory_space<vmem>>, %arg12: memref<128x128xbf16, #tpu.memory_space<vmem>>, %arg13: memref<128x128xbf16, #tpu.memory_space<vmem>>, %arg14: memref<1x128xf32, #tpu.memory_space<vmem>>, %arg15: memref<8x128xf32, #tpu.memory_space<vmem>>, %arg16: memref<128x128xbf16, #tpu.memory_space<vmem>>, %arg17: memref<128x128xbf16, #tpu.memory_space<vmem>>, %arg18: memref<8x128xf32, #tpu.memory_space<vmem>>) attributes {dimension_semantics = [#tpu.dimension_semantics<arbitrary>, #tpu.dimension_semantics<arbitrary>], iteration_bounds = array<i64: 2, 1>, scalar_prefetch = 0 : i64, scratch_operands = 3 : i64, tpu.core_type = #tpu.core_type<tc>, window_params = [{transform_indices = @transform_0, window_bounds = array<i64: 128, 128>}, {pipeline_mode = #tpu.pipeline_mode<synchronous>, transform_indices = @transform_1, window_bounds = array<i64: 128, 128>}, {pipeline_mode = #tpu.pipeline_mode<synchronous>, transform_indices = @transform_2, window_bounds = array<i64: 128, 128>}, {pipeline_mode = #tpu.pipeline_mode<synchronous>, transform_indices = @transform_3, window_bounds = array<i64: 1, 128>}, {pipeline_mode = #tpu.pipeline_mode<synchronous>, transform_indices = @transform_4, window_bounds = array<i64: 128, 128>}, {pipeline_mode = #tpu.pipeline_mode<synchronous>, transform_indices = @transform_5, window_bounds = array<i64: 1, 128>}, {transform_indices = @transform_6, window_bounds = array<i64: 8, 128>}, {pipeline_mode = #tpu.pipeline_mode<synchronous>, transform_indices = @transform_7, window_bounds = array<i64: 8, 128>}, {pipeline_mode = #tpu.pipeline_mode<synchronous>, transform_indices = @transform_8, window_bounds = array<i64: 128, 128>}, {pipeline_mode = #tpu.pipeline_mode<synchronous>, transform_indices = @transform_9, window_bounds = array<i64: 1, 128>}, {pipeline_mode = #tpu.pipeline_mode<synchronous>, transform_indices = @transform_10, window_bounds = array<i64: 128, 128>}, {pipeline_mode = #tpu.pipeline_mode<synchronous>, transform_indices = @transform_11, window_bounds = array<i64: 128, 128>}, {pipeline_mode = #tpu.pipeline_mode<synchronous>, transform_indices = @transform_12, window_bounds = array<i64: 1, 128>}, {pipeline_mode = #tpu.pipeline_mode<synchronous>, transform_indices = @transform_13, window_bounds = array<i64: 8, 128>}]} {
    %c0_i32 = arith.constant 0 : i32
    %0 = arith.cmpi eq, %arg0, %c0_i32 : i32
    %c0_i32_0 = arith.constant 0 : i32
    %1 = arith.cmpi eq, %arg1, %c0_i32_0 : i32
    %2 = arith.andi %0, %1 : i1
    %3 = arith.extui %2 : i1 to i32
    %c0_i32_1 = arith.constant 0 : i32
    %4 = arith.cmpi ne, %3, %c0_i32_1 : i32
    scf.if %4 {
      %c0_9 = arith.constant 0 : index
      %c0_10 = arith.constant 0 : index
      %17 = vector.load %arg3[%c0_9, %c0_10] : memref<128x128xbf16, #tpu.memory_space<vmem>>, vector<128x128xbf16>
      %c0_11 = arith.constant 0 : index
      %c0_12 = arith.constant 0 : index
      %18 = vector.load %arg4[%c0_11, %c0_12] : memref<128x128xbf16, #tpu.memory_space<vmem>>, vector<128x128xbf16>
      %cst = arith.constant dense<0.000000e+00> : vector<128x128xf32>
      %19 = tpu.matmul %17, %18, %cst {dimension_numbers = #tpu.dot_dimension_numbers<[1], [0], [0], [1], [0, 0, 1, 1], [], []>} : vector<128x128xbf16>, vector<128x128xbf16>, vector<128x128xf32> -> vector<128x128xf32>
      %20 = arith.truncf %19 : vector<128x128xf32> to vector<128x128xbf16>
      %c0_13 = arith.constant 0 : index
      %c0_14 = arith.constant 0 : index
      %21 = vector.load %arg16[%c0_13, %c0_14] : memref<128x128xbf16, #tpu.memory_space<vmem>>, vector<128x128xbf16>
      tpu.vector_store %arg16[%c0_13, %c0_14], %20 {strides = array<i32>} : memref<128x128xbf16, #tpu.memory_space<vmem>>, vector<128x128xbf16>,
      %cst_15 = arith.constant 0.000000e+00 : f32
      %22 = vector.broadcast %cst_15 : f32 to vector<8x128xf32>
      %c0_16 = arith.constant 0 : index
      %c0_17 = arith.constant 0 : index
      %23 = vector.load %arg18[%c0_16, %c0_17] : memref<8x128xf32, #tpu.memory_space<vmem>>, vector<8x128xf32>
      tpu.vector_store %arg18[%c0_16, %c0_17], %22 {strides = array<i32>} : memref<8x128xf32, #tpu.memory_space<vmem>>, vector<8x128xf32>,
    } else {
    }
    %c0 = arith.constant 0 : index
    %c0_2 = arith.constant 0 : index
    %5 = vector.load %arg2[%c0, %c0_2] : memref<128x128xbf16, #tpu.memory_space<vmem>>, vector<128x128xbf16>
    %c0_i32_3 = arith.constant 0 : i32
    %6 = arith.cmpi eq, %arg0, %c0_i32_3 : i32
    %7 = arith.extui %6 : i1 to i32
    %c0_i32_4 = arith.constant 0 : i32
    %8 = arith.cmpi ne, %7, %c0_i32_4 : i32
    scf.if %8 {
      %c0_9 = arith.constant 0 : index
      %c0_10 = arith.constant 0 : index
      %17 = vector.load %arg16[%c0_9, %c0_10] : memref<128x128xbf16, #tpu.memory_space<vmem>>, vector<128x128xbf16>
      %cst = arith.constant dense<0.000000e+00> : vector<128x128xf32>
      %18 = tpu.matmul %5, %17, %cst {dimension_numbers = #tpu.dot_dimension_numbers<[1], [0], [0], [1], [0, 0, 1, 1], [], []>} : vector<128x128xbf16>, vector<128x128xbf16>, vector<128x128xf32> -> vector<128x128xf32>
      %c0_11 = arith.constant 0 : index
      %c0_12 = arith.constant 0 : index
      %19 = vector.load %arg5[%c0_11, %c0_12] : memref<1x128xf32, #tpu.memory_space<vmem>>, vector<1x128xf32>
      %20 = vector.broadcast %19 : vector<1x128xf32> to vector<128x128xf32>
      %21 = arith.addf %18, %20 : vector<128x128xf32>
      %cst_13 = arith.constant 0.000000e+00 : f32
      %22 = vector.broadcast %cst_13 : f32 to vector<128x128xf32>
      %23 = arith.maximumf %21, %22 : vector<128x128xf32>
      %c128_i32 = arith.constant 128 : i32
      %24 = arith.muli %arg1, %c128_i32 : i32
      %25 = tpu.assume_multiple %24, 128 : i32
      %26 = arith.truncf %23 : vector<128x128xf32> to vector<128x128xbf16>
      %c0_14 = arith.constant 0 : index
      %c0_15 = arith.constant 0 : index
      %27 = vector.load %arg6[%c0_14, %c0_15] : memref<128x128xbf16, #tpu.memory_space<vmem>>, vector<128x128xbf16>
      %cst_16 = arith.constant dense<0.000000e+00> : vector<128x128xf32>
      %28 = tpu.matmul %26, %27, %cst_16 {dimension_numbers = #tpu.dot_dimension_numbers<[1], [0], [0], [1], [0, 0, 1, 1], [], []>} : vector<128x128xbf16>, vector<128x128xbf16>, vector<128x128xf32> -> vector<128x128xf32>
      %29 = arith.truncf %28 : vector<128x128xf32> to vector<128x128xbf16>
      %30 = arith.index_cast %25 : i32 to index
      %c0_17 = arith.constant 0 : index
      %31 = vector.load %arg17[%30, %c0_17] : memref<128x128xbf16, #tpu.memory_space<vmem>>, vector<128x128xbf16>
      tpu.vector_store %arg17[%30, %c0_17], %29 {strides = array<i32>} : memref<128x128xbf16, #tpu.memory_space<vmem>>, vector<128x128xbf16>,
    } else {
    }
    %c1_i32 = arith.constant 1 : i32
    %9 = arith.cmpi eq, %arg0, %c1_i32 : i32
    %10 = arith.extui %9 : i1 to i32
    %c0_i32_5 = arith.constant 0 : i32
    %11 = arith.cmpi ne, %10, %c0_i32_5 : i32
    scf.if %11 {
      %c0_9 = arith.constant 0 : index
      %c0_10 = arith.constant 0 : index
      %17 = vector.load %arg17[%c0_9, %c0_10] : memref<128x128xbf16, #tpu.memory_space<vmem>>, vector<128x128xbf16>
      %cst = arith.constant dense<0.000000e+00> : vector<128x128xf32>
      %18 = tpu.matmul %5, %17, %cst {dimension_numbers = #tpu.dot_dimension_numbers<[1], [0], [0], [1], [0, 0, 1, 1], [], []>} : vector<128x128xbf16>, vector<128x128xbf16>, vector<128x128xf32> -> vector<128x128xf32>
      %c0_11 = arith.constant 0 : index
      %c0_12 = arith.constant 0 : index
      %19 = vector.load %arg7[%c0_11, %c0_12] : memref<1x128xf32, #tpu.memory_space<vmem>>, vector<1x128xf32>
      %20 = vector.broadcast %19 : vector<1x128xf32> to vector<128x128xf32>
      %21 = arith.addf %18, %20 : vector<128x128xf32>
      %cst_13 = arith.constant 0.000000e+00 : f32
      %22 = vector.broadcast %cst_13 : f32 to vector<128x128xf32>
      %23 = arith.maximumf %21, %22 : vector<128x128xf32>
      %c0_14 = arith.constant 0 : index
      %c0_15 = arith.constant 0 : index
      %24 = vector.load %arg18[%c0_14, %c0_15] : memref<8x128xf32, #tpu.memory_space<vmem>>, vector<8x128xf32>
      %c0_16 = arith.constant 0 : index
      %c0_17 = arith.constant 0 : index
      %25 = vector.load %arg8[%c0_16, %c0_17] : memref<8x128xf32, #tpu.memory_space<vmem>>, vector<8x128xf32>
      %cst_18 = arith.constant dense<0.000000e+00> : vector<8x128xf32>
      %26 = tpu.matmul %25, %23, %cst_18 {dimension_numbers = #tpu.dot_dimension_numbers<[1], [0], [0], [1], [0, 0, 1, 1], [], []>} : vector<8x128xf32>, vector<128x128xf32>, vector<8x128xf32> -> vector<8x128xf32>
      %27 = arith.addf %24, %26 : vector<8x128xf32>
      %c0_19 = arith.constant 0 : index
      %c0_20 = arith.constant 0 : index
      %28 = vector.load %arg18[%c0_19, %c0_20] : memref<8x128xf32, #tpu.memory_space<vmem>>, vector<8x128xf32>
      tpu.vector_store %arg18[%c0_19, %c0_20], %27 {strides = array<i32>} : memref<8x128xf32, #tpu.memory_space<vmem>>, vector<8x128xf32>,
    } else {
    }
    %c1_i32_6 = arith.constant 1 : i32
    %12 = arith.cmpi eq, %arg0, %c1_i32_6 : i32
    %c0_i32_7 = arith.constant 0 : i32
    %13 = arith.cmpi eq, %arg1, %c0_i32_7 : i32
    %14 = arith.andi %12, %13 : i1
    %15 = arith.extui %14 : i1 to i32
    %c0_i32_8 = arith.constant 0 : i32
    %16 = arith.cmpi ne, %15, %c0_i32_8 : i32
    scf.if %16 {
      %c0_9 = arith.constant 0 : index
      %c0_10 = arith.constant 0 : index
      %17 = vector.load %arg9[%c0_9, %c0_10] : memref<8x128xbf16, #tpu.memory_space<vmem>>, vector<8x128xbf16>
      %c0_11 = arith.constant 0 : index
      %c0_12 = arith.constant 0 : index
      %18 = vector.load %arg10[%c0_11, %c0_12] : memref<128x128xbf16, #tpu.memory_space<vmem>>, vector<128x128xbf16>
      %cst = arith.constant dense<0.000000e+00> : vector<8x128xf32>
      %19 = tpu.matmul %17, %18, %cst {dimension_numbers = #tpu.dot_dimension_numbers<[1], [0], [0], [1], [0, 0, 1, 1], [], []>} : vector<8x128xbf16>, vector<128x128xbf16>, vector<8x128xf32> -> vector<8x128xf32>
      %c0_13 = arith.constant 0 : index
      %c0_14 = arith.constant 0 : index
      %20 = vector.load %arg11[%c0_13, %c0_14] : memref<1x128xf32, #tpu.memory_space<vmem>>, vector<1x128xf32>
      %21 = vector.broadcast %20 : vector<1x128xf32> to vector<8x128xf32>
      %22 = arith.addf %19, %21 : vector<8x128xf32>
      %cst_15 = arith.constant 0.000000e+00 : f32
      %23 = vector.broadcast %cst_15 : f32 to vector<8x128xf32>
      %24 = arith.maximumf %22, %23 : vector<8x128xf32>
      %c0_16 = arith.constant 0 : index
      %c0_17 = arith.constant 0 : index
      %25 = vector.load %arg18[%c0_16, %c0_17] : memref<8x128xf32, #tpu.memory_space<vmem>>, vector<8x128xf32>
      %26 = arith.truncf %25 : vector<8x128xf32> to vector<8x128xbf16>
      %c0_18 = arith.constant 0 : index
      %c0_19 = arith.constant 0 : index
      %27 = vector.load %arg12[%c0_18, %c0_19] : memref<128x128xbf16, #tpu.memory_space<vmem>>, vector<128x128xbf16>
      %cst_20 = arith.constant dense<0.000000e+00> : vector<8x128xf32>
      %28 = tpu.matmul %26, %27, %cst_20 {dimension_numbers = #tpu.dot_dimension_numbers<[1], [0], [0], [1], [0, 0, 1, 1], [], []>} : vector<8x128xbf16>, vector<128x128xbf16>, vector<8x128xf32> -> vector<8x128xf32>
      %29 = arith.truncf %24 : vector<8x128xf32> to vector<8x128xbf16>
      %c0_21 = arith.constant 0 : index
      %c0_22 = arith.constant 0 : index
      %30 = vector.load %arg13[%c0_21, %c0_22] : memref<128x128xbf16, #tpu.memory_space<vmem>>, vector<128x128xbf16>
      %cst_23 = arith.constant dense<0.000000e+00> : vector<8x128xf32>
      %31 = tpu.matmul %29, %30, %cst_23 {dimension_numbers = #tpu.dot_dimension_numbers<[1], [0], [0], [1], [0, 0, 1, 1], [], []>} : vector<8x128xbf16>, vector<128x128xbf16>, vector<8x128xf32> -> vector<8x128xf32>
      %32 = arith.addf %28, %31 : vector<8x128xf32>
      %c0_24 = arith.constant 0 : index
      %c0_25 = arith.constant 0 : index
      %33 = vector.load %arg14[%c0_24, %c0_25] : memref<1x128xf32, #tpu.memory_space<vmem>>, vector<1x128xf32>
      %34 = vector.broadcast %33 : vector<1x128xf32> to vector<8x128xf32>
      %35 = arith.addf %32, %34 : vector<8x128xf32>
      %c0_26 = arith.constant 0 : index
      %c0_27 = arith.constant 0 : index
      %36 = vector.load %arg15[%c0_26, %c0_27] : memref<8x128xf32, #tpu.memory_space<vmem>>, vector<8x128xf32>
      tpu.vector_store %arg15[%c0_26, %c0_27], %35 {strides = array<i32>} : memref<8x128xf32, #tpu.memory_space<vmem>>, vector<8x128xf32>,
    } else {
    }
    return
  }
  func.func @transform_0(%arg0: i32, %arg1: i32) -> (i32, i32) {
    %c0_i32 = arith.constant 0 : i32
    %c0_i32_0 = arith.constant 0 : i32
    return %arg1, %c0_i32 : i32, i32
  }
  func.func @transform_1(%arg0: i32, %arg1: i32) -> (i32, i32) {
    %c0_i32 = arith.constant 0 : i32
    %c0_i32_0 = arith.constant 0 : i32
    %c0_i32_1 = arith.constant 0 : i32
    return %c0_i32, %c0_i32_0 : i32, i32
  }
  func.func @transform_2(%arg0: i32, %arg1: i32) -> (i32, i32) {
    %c0_i32 = arith.constant 0 : i32
    %c0_i32_0 = arith.constant 0 : i32
    %c0_i32_1 = arith.constant 0 : i32
    return %c0_i32, %c0_i32_0 : i32, i32
  }
  func.func @transform_3(%arg0: i32, %arg1: i32) -> (i32, i32) {
    %c0_i32 = arith.constant 0 : i32
    %c0_i32_0 = arith.constant 0 : i32
    %c0_i32_1 = arith.constant 0 : i32
    return %c0_i32, %c0_i32_0 : i32, i32
  }
  func.func @transform_4(%arg0: i32, %arg1: i32) -> (i32, i32) {
    %c0_i32 = arith.constant 0 : i32
    %c0_i32_0 = arith.constant 0 : i32
    %c0_i32_1 = arith.constant 0 : i32
    return %c0_i32, %c0_i32_0 : i32, i32
  }
  func.func @transform_5(%arg0: i32, %arg1: i32) -> (i32, i32) {
    %c0_i32 = arith.constant 0 : i32
    %c0_i32_0 = arith.constant 0 : i32
    %c0_i32_1 = arith.constant 0 : i32
    return %c0_i32, %c0_i32_0 : i32, i32
  }
  func.func @transform_6(%arg0: i32, %arg1: i32) -> (i32, i32) {
    %c0_i32 = arith.constant 0 : i32
    %c0_i32_0 = arith.constant 0 : i32
    return %c0_i32, %arg1 : i32, i32
  }
  func.func @transform_7(%arg0: i32, %arg1: i32) -> (i32, i32) {
    %c0_i32 = arith.constant 0 : i32
    %c0_i32_0 = arith.constant 0 : i32
    %c0_i32_1 = arith.constant 0 : i32
    return %c0_i32, %c0_i32_0 : i32, i32
  }
  func.func @transform_8(%arg0: i32, %arg1: i32) -> (i32, i32) {
    %c0_i32 = arith.constant 0 : i32
    %c0_i32_0 = arith.constant 0 : i32
    %c0_i32_1 = arith.constant 0 : i32
    return %c0_i32, %c0_i32_0 : i32, i32
  }
  func.func @transform_9(%arg0: i32, %arg1: i32) -> (i32, i32) {
    %c0_i32 = arith.constant 0 : i32
    %c0_i32_0 = arith.constant 0 : i32
    %c0_i32_1 = arith.constant 0 : i32
    return %c0_i32, %c0_i32_0 : i32, i32
  }
  func.func @transform_10(%arg0: i32, %arg1: i32) -> (i32, i32) {
    %c0_i32 = arith.constant 0 : i32
    %c0_i32_0 = arith.constant 0 : i32
    %c0_i32_1 = arith.constant 0 : i32
    return %c0_i32, %c0_i32_0 : i32, i32
  }
  func.func @transform_11(%arg0: i32, %arg1: i32) -> (i32, i32) {
    %c0_i32 = arith.constant 0 : i32
    %c0_i32_0 = arith.constant 0 : i32
    %c0_i32_1 = arith.constant 0 : i32
    return %c0_i32, %c0_i32_0 : i32, i32
  }
  func.func @transform_12(%arg0: i32, %arg1: i32) -> (i32, i32) {
    %c0_i32 = arith.constant 0 : i32
    %c0_i32_0 = arith.constant 0 : i32
    %c0_i32_1 = arith.constant 0 : i32
    return %c0_i32, %c0_i32_0 : i32, i32
  }
  func.func @transform_13(%arg0: i32, %arg1: i32) -> (i32, i32) {
    %c0_i32 = arith.constant 0 : i32
    %c0_i32_0 = arith.constant 0 : i32
    %c0_i32_1 = arith.constant 0 : i32
    return %c0_i32, %c0_i32_0 : i32, i32
  }
}

</mosaic_0001>

<llo_original>
// kernel: gcn_forward.1
$region0: #{gcn_forward.1}
  #allocation0 [shape = 'u32[]', space=smem, size = 0x4, offset = 0x4, fixed_abs, tag = 'smem constant byte address 0x4 - core index']
  #allocation1 [shape = 'u32[144,128]{1,0:T(1,128)}', space=vmem, size = 0x12000, scoped, tag = 'internal scratch']
  #allocation2 [shape = 'bf16[128,128]{1,0:T(16,128)(2,1)}', space=vmem, size = 0x8000, scoped, tag = 'scratch operand']
  #allocation3 [shape = 'bf16[128,128]{1,0:T(16,128)(2,1)}', space=vmem, size = 0x8000, scoped, tag = 'scratch operand']
  #allocation4 [shape = 'f32[8,128]{1,0:T(8,128)}', space=vmem, size = 0x1000, scoped, tag = 'scratch operand']
  %s0 = inlined_call_operand.vmem [shape: bf16[128,128], index: 0, kind: input, shape index: {}]
  %s1 = inlined_call_operand.vmem [shape: bf16[128,128], index: 1, kind: input, shape index: {}]
  %s2 = inlined_call_operand.vmem [shape: bf16[128,128], index: 2, kind: input, shape index: {}]
  %s3 = inlined_call_operand.vmem [shape: f32[1,128], index: 3, kind: input, shape index: {}]
  %s4 = inlined_call_operand.vmem [shape: bf16[128,128], index: 4, kind: input, shape index: {}]
  %s5 = inlined_call_operand.vmem [shape: f32[1,128], index: 5, kind: input, shape index: {}]
  %s6 = inlined_call_operand.vmem [shape: f32[8,128], index: 6, kind: input, shape index: {}]
  %s7 = inlined_call_operand.vmem [shape: bf16[8,128], index: 7, kind: input, shape index: {}]
  %s8 = inlined_call_operand.vmem [shape: bf16[128,128], index: 8, kind: input, shape index: {}]
  %s9 = inlined_call_operand.vmem [shape: f32[1,128], index: 9, kind: input, shape index: {}]
  %s10 = inlined_call_operand.vmem [shape: bf16[128,128], index: 10, kind: input, shape index: {}]
  %s11 = inlined_call_operand.vmem [shape: bf16[128,128], index: 11, kind: input, shape index: {}]
  %s12 = inlined_call_operand.vmem [shape: f32[1,128], index: 12, kind: input, shape index: {}]
  %s13 = inlined_call_operand.vmem [shape: f32[8,128], index: 13, kind: output, shape index: {}]
  %s14 = sld [smem:[#allocation0]]
  $region101: #{gcn_forward.1} parent=0
    _
  %s16 = ssub.s32 1, %s14
  %s17 = scalar_select 0, %s16, %s14
  loop: start=0, step=1, limit=4
  $region2: #{gcn_forward.1} parent=0 // loop_pre_header
    _
  $region3: #{gcn_forward.1} parent=0 // loop_header
    %s19 = sphi 0, %s23
    %p20 = scmp.ge.s32.totalorder %s19, 4
    %s26 = sphi 0, %s38
    %s27 = sphi 0, %s34
    %s28 = sphi 0, %s26
    %s29 = sphi 0, %s27
    %s30 = sphi 0, %s28
    %s31 = sphi 0, %s29
    %s41 = sphi 0, %s43
    %s44 = sphi 0, %s41
    %s45 = sphi 0, %s44
    %s61 = sphi 0, %s45
    %s65 = sphi 0, %s65
    %s67 = sphi 0, %s65
    %s68 = sphi 0, %s67
    %s82 = sphi 0, %s68
    %s86 = sphi 0, %s86
    %s88 = sphi 0, %s86
    %s89 = sphi 0, %s88
    %s103 = sphi 0, %s89
    %s107 = sphi 0, %s107
    %s109 = sphi 0, %s107
    %s110 = sphi 0, %s109
    %s124 = sphi 0, %s110
    %s128 = sphi 0, %s128
    %s130 = sphi 0, %s128
    %s131 = sphi 0, %s130
    %s145 = sphi 0, %s131
    %s149 = sphi 0, %s149
    %s151 = sphi 0, %s149
    %s152 = sphi 0, %s151
    %s166 = sphi 0, %s152
    %s172 = sphi 0, %s174
    %s175 = sphi 0, %s172
    %s176 = sphi 0, %s175
    %s192 = sphi 0, %s176
    %s196 = sphi 0, %s196
    %s198 = sphi 0, %s196
    %s199 = sphi 0, %s198
    %s213 = sphi 0, %s199
    %s217 = sphi 0, %s217
    %s219 = sphi 0, %s217
    %s220 = sphi 0, %s219
    %s234 = sphi 0, %s220
    %s238 = sphi 0, %s238
    %s240 = sphi 0, %s238
    %s241 = sphi 0, %s240
    %s255 = sphi 0, %s241
    %s259 = sphi 0, %s259
    %s261 = sphi 0, %s259
    %s262 = sphi 0, %s261
    %s276 = sphi 0, %s262
    %s280 = sphi 0, %s280
    %s282 = sphi 0, %s280
    %s283 = sphi 0, %s282
    %s297 = sphi 0, %s283
    %s301 = sphi 0, %s301
    %s303 = sphi 0, %s301
    %s304 = sphi 0, %s303
    %s318 = sphi 0, %s304
    %s322 = sphi 0, %s322
    %s324 = sphi 0, %s322
    %s325 = sphi 0, %s324
    %s339 = sphi 0, %s325
  $region4: #{gcn_forward.1} parent=0 // loop_header_branch
    %22 = sbr.rel (%p20) target = $region8
  $region5: #{gcn_forward.1} parent=0 // loop_body
    %s24 = ssub.s32 %s19, 1
    %s25 = ssub.s32 %s19, 2
    %s32 = sadd.s32 1, %s27
    %p33 = scmp.ge.s32.totalorder %s32, 1
    %s34 = scalar_select %p33, 0, %s32
    %s35 = sadd.s32 1, %s26
    %s36 = scalar_select %p33, %s35, %s26
    %p37 = scmp.ge.s32.totalorder %s36, 2
    %s38 = scalar_select %p37, 0, %s36
    %s39 = ssub.s32 %s27, %s34
    %p40 = scmp.eq.s32.totalorder %s39, 0
    %s42 = sadd.s32 %s41, 1
    %s43 = scalar_select %p40, %s41, %s42
    %p46 = pneg %p40
    %p47 = scmp.eq.s32.totalorder %s19, 1
    %p48 = por %p46, %p47
    %p49 = scmp.ne.s32.totalorder %s41, %s44
    %p50 = scmp.eq.s32.totalorder %s19, 0
    %p51 = por %p49, %p50
    %p52 = scmp.ne.s32.totalorder %s41, %s44
    %p53 = scmp.eq.s32.totalorder %s24, 1
    %p54 = por %p52, %p53
    %p55 = scmp.ne.s32.totalorder %s44, %s45
    %p56 = scmp.eq.s32.totalorder %s24, 0
    %p57 = por %p55, %p56
    %p58 = scmp.ne.s32.totalorder %s44, %s45
    %p59 = scmp.eq.s32.totalorder %s25, 1
    %p60 = por %p58, %p59
    %p62 = scmp.ne.s32.totalorder %s45, %s61
    %p63 = scmp.eq.s32.totalorder %s25, 0
    %p64 = por %p62, %p63
    %s66 = sadd.s32 %s65, 1
    %p69 = scmp.eq.s32.totalorder %s19, 1
    %p70 = scmp.ne.s32.totalorder %s65, %s67
    %p71 = scmp.eq.s32.totalorder %s19, 0
    %p72 = por %p70, %p71
    %p73 = scmp.ne.s32.totalorder %s65, %s67
    %p74 = scmp.eq.s32.totalorder %s24, 1
    %p75 = por %p73, %p74
    %p76 = scmp.ne.s32.totalorder %s67, %s68
    %p77 = scmp.eq.s32.totalorder %s24, 0
    %p78 = por %p76, %p77
    %p79 = scmp.ne.s32.totalorder %s67, %s68
    %p80 = scmp.eq.s32.totalorder %s25, 1
    %p81 = por %p79, %p80
    %p83 = scmp.ne.s32.totalorder %s68, %s82
    %p84 = scmp.eq.s32.totalorder %s25, 0
    %p85 = por %p83, %p84
    %s87 = sadd.s32 %s86, 1
    %p90 = scmp.eq.s32.totalorder %s19, 1
    %p91 = scmp.ne.s32.totalorder %s86, %s88
    %p92 = scmp.eq.s32.totalorder %s19, 0
    %p93 = por %p91, %p92
    %p94 = scmp.ne.s32.totalorder %s86, %s88
    %p95 = scmp.eq.s32.totalorder %s24, 1
    %p96 = por %p94, %p95
    %p97 = scmp.ne.s32.totalorder %s88, %s89
    %p98 = scmp.eq.s32.totalorder %s24, 0
    %p99 = por %p97, %p98
    %p100 = scmp.ne.s32.totalorder %s88, %s89
    %p101 = scmp.eq.s32.totalorder %s25, 1
    %p102 = por %p100, %p101
    %p104 = scmp.ne.s32.totalorder %s89, %s103
    %p105 = scmp.eq.s32.totalorder %s25, 0
    %p106 = por %p104, %p105
    %s108 = sadd.s32 %s107, 1
    %p111 = scmp.eq.s32.totalorder %s19, 1
    %p112 = scmp.ne.s32.totalorder %s107, %s109
    %p113 = scmp.eq.s32.totalorder %s19, 0
    %p114 = por %p112, %p113
    %p115 = scmp.ne.s32.totalorder %s107, %s109
    %p116 = scmp.eq.s32.totalorder %s24, 1
    %p117 = por %p115, %p116
    %p118 = scmp.ne.s32.totalorder %s109, %s110
    %p119 = scmp.eq.s32.totalorder %s24, 0
    %p120 = por %p118, %p119
    %p121 = scmp.ne.s32.totalorder %s109, %s110
    %p122 = scmp.eq.s32.totalorder %s25, 1
    %p123 = por %p121, %p122
    %p125 = scmp.ne.s32.totalorder %s110, %s124
    %p126 = scmp.eq.s32.totalorder %s25, 0
    %p127 = por %p125, %p126
    %s129 = sadd.s32 %s128, 1
    %p132 = scmp.eq.s32.totalorder %s19, 1
    %p133 = scmp.ne.s32.totalorder %s128, %s130
    %p134 = scmp.eq.s32.totalorder %s19, 0
    %p135 = por %p133, %p134
    %p136 = scmp.ne.s32.totalorder %s128, %s130
    %p137 = scmp.eq.s32.totalorder %s24, 1
    %p138 = por %p136, %p137
    %p139 = scmp.ne.s32.totalorder %s130, %s131
    %p140 = scmp.eq.s32.totalorder %s24, 0
    %p141 = por %p139, %p140
    %p142 = scmp.ne.s32.totalorder %s130, %s131
    %p143 = scmp.eq.s32.totalorder %s25, 1
    %p144 = por %p142, %p143
    %p146 = scmp.ne.s32.totalorder %s131, %s145
    %p147 = scmp.eq.s32.totalorder %s25, 0
    %p148 = por %p146, %p147
    %s150 = sadd.s32 %s149, 1
    %p153 = scmp.eq.s32.totalorder %s19, 1
    %p154 = scmp.ne.s32.totalorder %s149, %s151
    %p155 = scmp.eq.s32.totalorder %s19, 0
    %p156 = por %p154, %p155
    %p157 = scmp.ne.s32.totalorder %s149, %s151
    %p158 = scmp.eq.s32.totalorder %s24, 1
    %p159 = por %p157, %p158
    %p160 = scmp.ne.s32.totalorder %s151, %s152
    %p161 = scmp.eq.s32.totalorder %s24, 0
    %p162 = por %p160, %p161
    %p163 = scmp.ne.s32.totalorder %s151, %s152
    %p164 = scmp.eq.s32.totalorder %s25, 1
    %p165 = por %p163, %p164
    %p167 = scmp.ne.s32.totalorder %s152, %s166
    %p168 = scmp.eq.s32.totalorder %s25, 0
    %p169 = por %p167, %p168
    %s170 = ssub.s32 %s27, %s34
    %p171 = scmp.eq.s32.totalorder %s170, 0
    %s173 = sadd.s32 %s172, 1
    %s174 = scalar_select %p171, %s172, %s173
    %p177 = pneg %p171
    %p178 = scmp.eq.s32.totalorder %s19, 1
    %p179 = por %p177, %p178
    %p180 = scmp.ne.s32.totalorder %s172, %s175
    %p181 = scmp.eq.s32.totalorder %s19, 0
    %p182 = por %p180, %p181
    %p183 = scmp.ne.s32.totalorder %s172, %s175
    %p184 = scmp.eq.s32.totalorder %s24, 1
    %p185 = por %p183, %p184
    %p186 = scmp.ne.s32.totalorder %s175, %s176
    %p187 = scmp.eq.s32.totalorder %s24, 0
    %p188 = por %p186, %p187
    %p189 = scmp.ne.s32.totalorder %s175, %s176
    %p190 = scmp.eq.s32.totalorder %s25, 1
    %p191 = por %p189, %p190
    %p193 = scmp.ne.s32.totalorder %s176, %s192
    %p194 = scmp.eq.s32.totalorder %s25, 0
    %p195 = por %p193, %p194
    %s197 = sadd.s32 %s196, 1
    %p200 = scmp.eq.s32.totalorder %s19, 1
    %p201 = scmp.ne.s32.totalorder %s196, %s198
    %p202 = scmp.eq.s32.totalorder %s19, 0
    %p203 = por %p201, %p202
    %p204 = scmp.ne.s32.totalorder %s196, %s198
    %p205 = scmp.eq.s32.totalorder %s24, 1
    %p206 = por %p204, %p205
    %p207 = scmp.ne.s32.totalorder %s198, %s199
    %p208 = scmp.eq.s32.totalorder %s24, 0
    %p209 = por %p207, %p208
    %p210 = scmp.ne.s32.totalorder %s198, %s199
    %p211 = scmp.eq.s32.totalorder %s25, 1
    %p212 = por %p210, %p211
    %p214 = scmp.ne.s32.totalorder %s199, %s213
    %p215 = scmp.eq.s32.totalorder %s25, 0
    %p216 = por %p214, %p215
    %s218 = sadd.s32 %s217, 1
    %p221 = scmp.eq.s32.totalorder %s19, 1
    %p222 = scmp.ne.s32.totalorder %s217, %s219
    %p223 = scmp.eq.s32.totalorder %s19, 0
    %p224 = por %p222, %p223
    %p225 = scmp.ne.s32.totalorder %s217, %s219
    %p226 = scmp.eq.s32.totalorder %s24, 1
    %p227 = por %p225, %p226
    %p228 = scmp.ne.s32.totalorder %s219, %s220
    %p229 = scmp.eq.s32.totalorder %s24, 0
    %p230 = por %p228, %p229
    %p231 = scmp.ne.s32.totalorder %s219, %s220
    %p232 = scmp.eq.s32.totalorder %s25, 1
    %p233 = por %p231, %p232
    %p235 = scmp.ne.s32.totalorder %s220, %s234
    %p236 = scmp.eq.s32.totalorder %s25, 0
    %p237 = por %p235, %p236
    %s239 = sadd.s32 %s238, 1
    %p242 = scmp.eq.s32.totalorder %s19, 1
    %p243 = scmp.ne.s32.totalorder %s238, %s240
    %p244 = scmp.eq.s32.totalorder %s19, 0
    %p245 = por %p243, %p244
    %p246 = scmp.ne.s32.totalorder %s238, %s240
    %p247 = scmp.eq.s32.totalorder %s24, 1
    %p248 = por %p246, %p247
    %p249 = scmp.ne.s32.totalorder %s240, %s241
    %p250 = scmp.eq.s32.totalorder %s24, 0
    %p251 = por %p249, %p250
    %p252 = scmp.ne.s32.totalorder %s240, %s241
    %p253 = scmp.eq.s32.totalorder %s25, 1
    %p254 = por %p252, %p253
    %p256 = scmp.ne.s32.totalorder %s241, %s255
    %p257 = scmp.eq.s32.totalorder %s25, 0
    %p258 = por %p256, %p257
    %s260 = sadd.s32 %s259, 1
    %p263 = scmp.eq.s32.totalorder %s19, 1
    %p264 = scmp.ne.s32.totalorder %s259, %s261
    %p265 = scmp.eq.s32.totalorder %s19, 0
    %p266 = por %p264, %p265
    %p267 = scmp.ne.s32.totalorder %s259, %s261
    %p268 = scmp.eq.s32.totalorder %s24, 1
    %p269 = por %p267, %p268
    %p270 = scmp.ne.s32.totalorder %s261, %s262
    %p271 = scmp.eq.s32.totalorder %s24, 0
    %p272 = por %p270, %p271
    %p273 = scmp.ne.s32.totalorder %s261, %s262
    %p274 = scmp.eq.s32.totalorder %s25, 1
    %p275 = por %p273, %p274
    %p277 = scmp.ne.s32.totalorder %s262, %s276
    %p278 = scmp.eq.s32.totalorder %s25, 0
    %p279 = por %p277, %p278
    %s281 = sadd.s32 %s280, 1
    %p284 = scmp.eq.s32.totalorder %s19, 1
    %p285 = scmp.ne.s32.totalorder %s280, %s282
    %p286 = scmp.eq.s32.totalorder %s19, 0
    %p287 = por %p285, %p286
    %p288 = scmp.ne.s32.totalorder %s280, %s282
    %p289 = scmp.eq.s32.totalorder %s24, 1
    %p290 = por %p288, %p289
    %p291 = scmp.ne.s32.totalorder %s282, %s283
    %p292 = scmp.eq.s32.totalorder %s24, 0
    %p293 = por %p291, %p292
    %p294 = scmp.ne.s32.totalorder %s282, %s283
    %p295 = scmp.eq.s32.totalorder %s25, 1
    %p296 = por %p294, %p295
    %p298 = scmp.ne.s32.totalorder %s283, %s297
    %p299 = scmp.eq.s32.totalorder %s25, 0
    %p300 = por %p298, %p299
    %s302 = sadd.s32 %s301, 1
    %p305 = scmp.eq.s32.totalorder %s19, 1
    %p306 = scmp.ne.s32.totalorder %s301, %s303
    %p307 = scmp.eq.s32.totalorder %s19, 0
    %p308 = por %p306, %p307
    %p309 = scmp.ne.s32.totalorder %s301, %s303
    %p310 = scmp.eq.s32.totalorder %s24, 1
    %p311 = por %p309, %p310
    %p312 = scmp.ne.s32.totalorder %s303, %s304
    %p313 = scmp.eq.s32.totalorder %s24, 0
    %p314 = por %p312, %p313
    %p315 = scmp.ne.s32.totalorder %s303, %s304
    %p316 = scmp.eq.s32.totalorder %s25, 1
    %p317 = por %p315, %p316
    %p319 = scmp.ne.s32.totalorder %s304, %s318
    %p320 = scmp.eq.s32.totalorder %s25, 0
    %p321 = por %p319, %p320
    %s323 = sadd.s32 %s322, 1
    %p326 = scmp.eq.s32.totalorder %s19, 1
    %p327 = scmp.ne.s32.totalorder %s322, %s324
    %p328 = scmp.eq.s32.totalorder %s19, 0
    %p329 = por %p327, %p328
    %p330 = scmp.ne.s32.totalorder %s322, %s324
    %p331 = scmp.eq.s32.totalorder %s24, 1
    %p332 = por %p330, %p331
    %p333 = scmp.ne.s32.totalorder %s324, %s325
    %p334 = scmp.eq.s32.totalorder %s24, 0
    %p335 = por %p333, %p334
    %p336 = scmp.ne.s32.totalorder %s324, %s325
    %p337 = scmp.eq.s32.totalorder %s25, 1
    %p338 = por %p336, %p337
    %p340 = scmp.ne.s32.totalorder %s325, %s339
    %p341 = scmp.eq.s32.totalorder %s25, 0
    %p342 = por %p340, %p341
    %p343 = scmp.le.s32.totalorder 1, %s19
    %p344 = scmp.lt.s32.totalorder %s19, 3
    %p345 = pnand %p343, %p344
    %p346 = pneg %p345
    // Predicated region
    $region9: #{gcn_forward.1} parent=5 // pred_check
      _
    $region10: #{gcn_forward.1} parent=5 // pred_check_branch
      %348 = sbr.rel (%p345) target = $region12
    $region11: #{gcn_forward.1} parent=5 // pred_region
      %s349 = ssub.s32 %s19, 1
      // Predicated region
      $region13: #{gcn_forward.1} parent=11 // pred_check
        %p350 = pneg %p57
      $region14: #{gcn_forward.1} parent=11 // pred_check_branch
        %352 = sbr.rel (%p350) target = $region16
      $region15: #{gcn_forward.1} parent=11 // pred_region
        %s353 = smul.u32 16, %s29
        %p354 = scmp.lt.s32.totalorder %s353, 15
        %s355 = scalar_select %p354, %s353, 15
        %s356 = smul.addr %s355, 4
        %s357 = scalar_lea.vmem %s0, %s356
        %s358 = smul.u32 16, %s29
      $region16: #{gcn_forward.1} parent=11 // pred_fallthru
        _
      // Predicated region
      $region17: #{gcn_forward.1} parent=11 // pred_check
        %p359 = pneg %p78
      $region18: #{gcn_forward.1} parent=11 // pred_check_branch
        %361 = sbr.rel (%p359) target = $region20
      $region19: #{gcn_forward.1} parent=11 // pred_region
        _
      $region20: #{gcn_forward.1} parent=11 // pred_fallthru
        _
      // Predicated region
      $region21: #{gcn_forward.1} parent=11 // pred_check
        %p362 = pneg %p99
      $region22: #{gcn_forward.1} parent=11 // pred_check_branch
        %364 = sbr.rel (%p362) target = $region24
      $region23: #{gcn_forward.1} parent=11 // pred_region
        _
      $region24: #{gcn_forward.1} parent=11 // pred_fallthru
        _
      // Predicated region
      $region25: #{gcn_forward.1} parent=11 // pred_check
        %p365 = pneg %p120
      $region26: #{gcn_forward.1} parent=11 // pred_check_branch
        %367 = sbr.rel (%p365) target = $region28
      $region27: #{gcn_forward.1} parent=11 // pred_region
        _
      $region28: #{gcn_forward.1} parent=11 // pred_fallthru
        _
      // Predicated region
      $region29: #{gcn_forward.1} parent=11 // pred_check
        %p368 = pneg %p141
      $region30: #{gcn_forward.1} parent=11 // pred_check_branch
        %370 = sbr.rel (%p368) target = $region32
      $region31: #{gcn_forward.1} parent=11 // pred_region
        _
      $region32: #{gcn_forward.1} parent=11 // pred_fallthru
        _
      // Predicated region
      $region33: #{gcn_forward.1} parent=11 // pred_check
        %p371 = pneg %p162
      $region34: #{gcn_forward.1} parent=11 // pred_check_branch
        %373 = sbr.rel (%p371) target = $region36
      $region35: #{gcn_forward.1} parent=11 // pred_region
        _
      $region36: #{gcn_forward.1} parent=11 // pred_fallthru
        _
      // Predicated region
      $region37: #{gcn_forward.1} parent=11 // pred_check
        %p374 = pneg %p188
      $region38: #{gcn_forward.1} parent=11 // pred_check_branch
        %376 = sbr.rel (%p374) target = $region40
      $region39: #{gcn_forward.1} parent=11 // pred_region
        %p377 = scmp.lt.s32.totalorder %s29, 0
        %s378 = scalar_select %p377, %s29, 0
        %s379 = smul.addr %s378, 8
        %s380 = scalar_lea.vmem %s6, %s379
      $region40: #{gcn_forward.1} parent=11 // pred_fallthru
        _
      // Predicated region
      $region41: #{gcn_forward.1} parent=11 // pred_check
        %p381 = pneg %p209
      $region42: #{gcn_forward.1} parent=11 // pred_check_branch
        %383 = sbr.rel (%p381) target = $region44
      $region43: #{gcn_forward.1} parent=11 // pred_region
        _
      $region44: #{gcn_forward.1} parent=11 // pred_fallthru
        _
      // Predicated region
      $region45: #{gcn_forward.1} parent=11 // pred_check
        %p384 = pneg %p230
      $region46: #{gcn_forward.1} parent=11 // pred_check_branch
        %386 = sbr.rel (%p384) target = $region48
      $region47: #{gcn_forward.1} parent=11 // pred_region
        _
      $region48: #{gcn_forward.1} parent=11 // pred_fallthru
        _
      // Predicated region
      $region49: #{gcn_forward.1} parent=11 // pred_check
        %p387 = pneg %p251
      $region50: #{gcn_forward.1} parent=11 // pred_check_branch
        %389 = sbr.rel (%p387) target = $region52
      $region51: #{gcn_forward.1} parent=11 // pred_region
        _
      $region52: #{gcn_forward.1} parent=11 // pred_fallthru
        _
      // Predicated region
      $region53: #{gcn_forward.1} parent=11 // pred_check
        %p390 = pneg %p272
      $region54: #{gcn_forward.1} parent=11 // pred_check_branch
        %392 = sbr.rel (%p390) target = $region56
      $region55: #{gcn_forward.1} parent=11 // pred_region
        _
      $region56: #{gcn_forward.1} parent=11 // pred_fallthru
        _
      // Predicated region
      $region57: #{gcn_forward.1} parent=11 // pred_check
        %p393 = pneg %p293
      $region58: #{gcn_forward.1} parent=11 // pred_check_branch
        %395 = sbr.rel (%p393) target = $region60
      $region59: #{gcn_forward.1} parent=11 // pred_region
        _
      $region60: #{gcn_forward.1} parent=11 // pred_fallthru
        _
      // Predicated region
      $region61: #{gcn_forward.1} parent=11 // pred_check
        %p396 = pneg %p314
      $region62: #{gcn_forward.1} parent=11 // pred_check_branch
        %398 = sbr.rel (%p396) target = $region64
      $region63: #{gcn_forward.1} parent=11 // pred_region
        _
      $region64: #{gcn_forward.1} parent=11 // pred_fallthru
        _
    $region12: #{gcn_forward.1} parent=5 // pred_fallthru
      _
    %p399 = scmp.lt.s32.totalorder %s19, 2
    // Predicated region
    $region65: #{gcn_forward.1} parent=5 // pred_check
      %p400 = pneg %p399
    $region66: #{gcn_forward.1} parent=5 // pred_check_branch
      %402 = sbr.rel (%p400) target = $region68
    $region67: #{gcn_forward.1} parent=5 // pred_region
      _
    $region68: #{gcn_forward.1} parent=5 // pred_fallthru
      _
    %p403 = scmp.le.s32.totalorder 1, %s19
    %p404 = scmp.lt.s32.totalorder %s19, 3
    %p405 = pnand %p403, %p404
    %p406 = pneg %p405
    // Predicated region
    $region69: #{gcn_forward.1} parent=5 // pred_check
      _
    $region70: #{gcn_forward.1} parent=5 // pred_check_branch
      %408 = sbr.rel (%p405) target = $region72
    $region71: #{gcn_forward.1} parent=5 // pred_region
      %s409 = ssub.s32 %s19, 1
      %s410 = smul.u32 16, %s29
      %p411 = scmp.lt.s32.totalorder %s410, 15
      %s412 = scalar_select %p411, %s410, 15
      %s413 = smul.addr %s412, 4
      %s414 = scalar_lea.vmem %s0, %s413
      %p415 = pneg %p57
      %p416 = pneg %p54
      %p417 = pneg %p78
      %p418 = pneg %p75
      %p419 = pneg %p99
      %p420 = pneg %p96
      %p421 = pneg %p120
      %p422 = pneg %p117
      %p423 = pneg %p141
      %p424 = pneg %p138
      %p425 = pneg %p162
      %p426 = pneg %p159
      %p427 = scmp.lt.s32.totalorder %s29, 0
      %s428 = scalar_select %p427, %s29, 0
      %s429 = smul.addr %s428, 8
      %s430 = scalar_lea.vmem %s6, %s429
      %p431 = pneg %p188
      %p432 = pneg %p185
      %p433 = pneg %p209
      %p434 = pneg %p206
      %p435 = pneg %p230
      %p436 = pneg %p227
      %p437 = pneg %p251
      %p438 = pneg %p248
      %p439 = pneg %p272
      %p440 = pneg %p269
      %p441 = pneg %p293
      %p442 = pneg %p290
      %p443 = pneg %p314
      %p444 = pneg %p311
      %p445 = pneg %p335
      %p446 = pneg %p332
      %s447 = smul.u32 16, %s29
      %p448 = scmp.lt.s32.totalorder %s447, 15
      %s449 = scalar_select %p448, %s447, 15
      %s450 = smul.addr %s449, 4
      %s451 = scalar_lea.vmem %s0, %s450
      %s452 = smul.u32 16, %s29
      %p453 = scmp.lt.s32.totalorder %s29, 0
      %s454 = scalar_select %p453, %s29, 0
      %s455 = smul.addr %s454, 8
      %s456 = scalar_lea.vmem %s6, %s455
      %p458 = scmp.eq.s32.totalorder %s28, 0
      %p459 = scmp.eq.s32.totalorder %s29, 0
      %p460 = pnand %p458, %p459
      %p461 = pneg %p460
      // Predicated region
      $region73: #{gcn_forward.1} parent=71 // pred_check
        _
      $region74: #{gcn_forward.1} parent=71 // pred_check_branch
        %463 = sbr.rel (%p460) target = $region76
      $region75: #{gcn_forward.1} parent=71 // pred_region
        %v464 = vld [vmem:[%s1] sm:$0xf]
        %v465 = vld [vmem:[%s1 + $0x4] sm:$0xf]
        %v466 = vld [vmem:[%s1 + $0x8] sm:$0xf]
        %v467 = vld [vmem:[%s1 + $0xc] sm:$0xf]
        %v468 = vld [vmem:[%s1 + $0x10] sm:$0xf]
        %v469 = vld [vmem:[%s1 + $0x14] sm:$0xf]
        %v470 = vld [vmem:[%s1 + $0x18] sm:$0xf]
        %v471 = vld [vmem:[%s1 + $0x1c] sm:$0xf]
        %v472 = vld [vmem:[%s1 + $0x20] sm:$0xf]
        %v473 = vld [vmem:[%s1 + $0x24] sm:$0xf]
        %v474 = vld [vmem:[%s1 + $0x28] sm:$0xf]
        %v475 = vld [vmem:[%s1 + $0x2c] sm:$0xf]
        %v476 = vld [vmem:[%s1 + $0x30] sm:$0xf]
        %v477 = vld [vmem:[%s1 + $0x34] sm:$0xf]
        %v478 = vld [vmem:[%s1 + $0x38] sm:$0xf]
        %v479 = vld [vmem:[%s1 + $0x3c] sm:$0xf]
        %v480 = vld [vmem:[%s2] sm:$0xf]
        %v481 = vld [vmem:[%s2 + $0x4] sm:$0xf]
        %v482 = vld [vmem:[%s2 + $0x8] sm:$0xf]
        %v483 = vld [vmem:[%s2 + $0xc] sm:$0xf]
        %v484 = vld [vmem:[%s2 + $0x10] sm:$0xf]
        %v485 = vld [vmem:[%s2 + $0x14] sm:$0xf]
        %v486 = vld [vmem:[%s2 + $0x18] sm:$0xf]
        %v487 = vld [vmem:[%s2 + $0x1c] sm:$0xf]
        %v488 = vld [vmem:[%s2 + $0x20] sm:$0xf]
        %v489 = vld [vmem:[%s2 + $0x24] sm:$0xf]
        %v490 = vld [vmem:[%s2 + $0x28] sm:$0xf]
        %v491 = vld [vmem:[%s2 + $0x2c] sm:$0xf]
        %v492 = vld [vmem:[%s2 + $0x30] sm:$0xf]
        %v493 = vld [vmem:[%s2 + $0x34] sm:$0xf]
        %v494 = vld [vmem:[%s2 + $0x38] sm:$0xf]
        %v495 = vld [vmem:[%s2 + $0x3c] sm:$0xf]
        %v512 = vunpack.c.l.b16 %v464
        %v513 = vunpack.c.l.b16 %v465
        %v514 = vunpack.c.l.b16 %v466
        %v515 = vunpack.c.l.b16 %v467
        %v516 = vunpack.c.l.b16 %v468
        %v517 = vunpack.c.l.b16 %v469
        %v518 = vunpack.c.l.b16 %v470
        %v519 = vunpack.c.l.b16 %v471
        %v520 = vunpack.c.l.b16 %v472
        %v521 = vunpack.c.l.b16 %v473
        %v522 = vunpack.c.l.b16 %v474
        %v523 = vunpack.c.l.b16 %v475
        %v524 = vunpack.c.l.b16 %v476
        %v525 = vunpack.c.l.b16 %v477
        %v526 = vunpack.c.l.b16 %v478
        %v527 = vunpack.c.l.b16 %v479
        %v528 = vpack.c.b16 %v513, %v512
        %v529 = vpack.c.b16 %v515, %v514
        %v530 = vpack.c.b16 %v517, %v516
        %v531 = vpack.c.b16 %v519, %v518
        %v532 = vpack.c.b16 %v521, %v520
        %v533 = vpack.c.b16 %v523, %v522
        %v534 = vpack.c.b16 %v525, %v524
        %v535 = vpack.c.b16 %v527, %v526
        %v560 = vunpack.c.l.b16 %v480
        %v561 = vunpack.c.l.b16 %v481
        %v562 = vunpack.c.l.b16 %v482
        %v563 = vunpack.c.l.b16 %v483
        %v564 = vunpack.c.l.b16 %v484
        %v565 = vunpack.c.l.b16 %v485
        %v566 = vunpack.c.l.b16 %v486
        %v567 = vunpack.c.l.b16 %v487
        %v568 = vunpack.c.l.b16 %v488
        %v569 = vunpack.c.l.b16 %v489
        %v570 = vunpack.c.l.b16 %v490
        %v571 = vunpack.c.l.b16 %v491
        %v572 = vunpack.c.l.b16 %v492
        %v573 = vunpack.c.l.b16 %v493
        %v574 = vunpack.c.l.b16 %v494
        %v575 = vunpack.c.l.b16 %v495
        %v576 = vpack.c.b16 %v561, %v560
        %v577 = vpack.c.b16 %v563, %v562
        %v578 = vpack.c.b16 %v565, %v564
        %v579 = vpack.c.b16 %v567, %v566
        %v580 = vpack.c.b16 %v569, %v568
        %v581 = vpack.c.b16 %v571, %v570
        %v582 = vpack.c.b16 %v573, %v572
        %v583 = vpack.c.b16 %v575, %v574
        %592 = vmatprep.subr.bf16.mxu0 0
        %593 = vmatpush1.bf16.msra.mxu0 %v576
        %594 = vmatprep.subr.bf16.mxu0 0
        %595 = vmatpush1.bf16.msra.mxu0 %v577
        %596 = vmatprep.subr.bf16.mxu0 0
        %597 = vmatpush1.bf16.msra.mxu0 %v578
        %598 = vmatprep.subr.bf16.mxu0 0
        %599 = vmatpush1.bf16.msra.mxu0 %v579
        %600 = vmatprep.subr.bf16.mxu0 0
        %601 = vmatpush1.bf16.msra.mxu0 %v580
        %602 = vmatprep.subr.bf16.mxu0 0
        %603 = vmatpush1.bf16.msra.mxu0 %v581
        %604 = vmatprep.subr.bf16.mxu0 0
        %605 = vmatpush1.bf16.msra.mxu0 %v582
        %606 = vmatprep.subr.bf16.mxu0 0
        %607 = vmatpush1.bf16.msra.mxu0 %v583
        %608 = vmatprep.subr.bf16.mxu0 0
        %609 = vmatpush1.bf16.msra.mxu0 0
        %610 = vmatprep.subr.bf16.mxu0 0
        %611 = vmatpush1.bf16.msra.mxu0 0
        %612 = vmatprep.subr.bf16.mxu0 0
        %613 = vmatpush1.bf16.msra.mxu0 0
        %614 = vmatprep.subr.bf16.mxu0 0
        %615 = vmatpush1.bf16.msra.mxu0 0
        %616 = vmatprep.subr.bf16.mxu0 0
        %617 = vmatpush1.bf16.msra.mxu0 0
        %618 = vmatprep.subr.bf16.mxu0 0
        %619 = vmatpush1.bf16.msra.mxu0 0
        %620 = vmatprep.subr.bf16.mxu0 0
        %621 = vmatpush1.bf16.msra.mxu0 0
        %622 = vmatprep.subr.bf16.mxu0 0
        %623 = vmatpush1.bf16.msra.mxu0 0
        %624 = vmatprep.mubr.bf16.mxu0 0
        %625 = vmatmul.mubr.bf16.gmra.mrb[0].mxu0 %v528
        %v626 = vpop.f32.mrb[0].mxu0
        %v627 = vadd.f32 0.0, %v626
        %v628 = vpop.f32.mrb[0].mxu0
        %v629 = vpop.f32.mrb[0].mxu0
        %v630 = vadd.f32 0.0, %v629
        %v631 = vpop.f32.mrb[0].mxu0
        %632 = vmatprep.mubr.bf16.mxu0 0
        %633 = vmatmul.mubr.bf16.gmra.mrb[0].mxu0 %v529
        %v634 = vpop.f32.mrb[0].mxu0
        %v635 = vadd.f32 0.0, %v634
        %v636 = vpop.f32.mrb[0].mxu0
        %v637 = vpop.f32.mrb[0].mxu0
        %v638 = vadd.f32 0.0, %v637
        %v639 = vpop.f32.mrb[0].mxu0
        %640 = vmatprep.mubr.bf16.mxu0 0
        %641 = vmatmul.mubr.bf16.gmra.mrb[0].mxu0 %v530
        %v642 = vpop.f32.mrb[0].mxu0
        %v643 = vadd.f32 0.0, %v642
        %v644 = vpop.f32.mrb[0].mxu0
        %v645 = vpop.f32.mrb[0].mxu0
        %v646 = vadd.f32 0.0, %v645
        %v647 = vpop.f32.mrb[0].mxu0
        %648 = vmatprep.mubr.bf16.mxu0 0
        %649 = vmatmul.mubr.bf16.gmra.mrb[0].mxu0 %v531
        %v650 = vpop.f32.mrb[0].mxu0
        %v651 = vadd.f32 0.0, %v650
        %v652 = vpop.f32.mrb[0].mxu0
        %v653 = vpop.f32.mrb[0].mxu0
        %v654 = vadd.f32 0.0, %v653
        %v655 = vpop.f32.mrb[0].mxu0
        %656 = vmatprep.mubr.bf16.mxu0 0
        %657 = vmatmul.mubr.bf16.gmra.mrb[0].mxu0 %v532
        %v658 = vpop.f32.mrb[0].mxu0
        %v659 = vadd.f32 0.0, %v658
        %v660 = vpop.f32.mrb[0].mxu0
        %v661 = vpop.f32.mrb[0].mxu0
        %v662 = vadd.f32 0.0, %v661
        %v663 = vpop.f32.mrb[0].mxu0
        %664 = vmatprep.mubr.bf16.mxu0 0
        %665 = vmatmul.mubr.bf16.gmra.mrb[0].mxu0 %v533
        %v666 = vpop.f32.mrb[0].mxu0
        %v667 = vadd.f32 0.0, %v666
        %v668 = vpop.f32.mrb[0].mxu0
        %v669 = vpop.f32.mrb[0].mxu0
        %v670 = vadd.f32 0.0, %v669
        %v671 = vpop.f32.mrb[0].mxu0
        %672 = vmatprep.mubr.bf16.mxu0 0
        %673 = vmatmul.mubr.bf16.gmra.mrb[0].mxu0 %v534
        %v674 = vpop.f32.mrb[0].mxu0
        %v675 = vadd.f32 0.0, %v674
        %v676 = vpop.f32.mrb[0].mxu0
        %v677 = vpop.f32.mrb[0].mxu0
        %v678 = vadd.f32 0.0, %v677
        %v679 = vpop.f32.mrb[0].mxu0
        %680 = vmatprep.mubr.bf16.mxu0 0
        %681 = vmatmul.mubr.bf16.gmra.mrb[0].mxu0 %v535
        %v682 = vpop.f32.mrb[0].mxu0
        %v683 = vadd.f32 0.0, %v682
        %v684 = vpop.f32.mrb[0].mxu0
        %v685 = vpop.f32.mrb[0].mxu0
        %v686 = vadd.f32 0.0, %v685
        %v687 = vpop.f32.mrb[0].mxu0
        %688 = vdwg.mxu0
        %v689 = vpack.c.bf16 %v630, %v627
        %v690 = vpack.c.bf16 %v638, %v635
        %v691 = vpack.c.bf16 %v646, %v643
        %v692 = vpack.c.bf16 %v654, %v651
        %v693 = vpack.c.bf16 %v662, %v659
        %v694 = vpack.c.bf16 %v670, %v667
        %v695 = vpack.c.bf16 %v678, %v675
        %v696 = vpack.c.bf16 %v686, %v683
        %697 = vst [vmem:[#allocation2] sm:$0xff] %v689
        %698 = vst [vmem:[#allocation2 + $0x8] sm:$0xff] %v690
        %699 = vst [vmem:[#allocation2 + $0x10] sm:$0xff] %v691
        %700 = vst [vmem:[#allocation2 + $0x18] sm:$0xff] %v692
        %701 = vst [vmem:[#allocation2 + $0x20] sm:$0xff] %v693
        %702 = vst [vmem:[#allocation2 + $0x28] sm:$0xff] %v694
        %703 = vst [vmem:[#allocation2 + $0x30] sm:$0xff] %v695
        %704 = vst [vmem:[#allocation2 + $0x38] sm:$0xff] %v696
        %705 = vst [vmem:[#allocation4] sm:$0xff] 0.0
      $region76: #{gcn_forward.1} parent=71 // pred_fallthru
        _
      %v706 = vld [vmem:[%s451] sm:$0xf]
      %v707 = vld [vmem:[%s451 + $0x4] sm:$0xf]
      %v708 = vld [vmem:[%s451 + $0x8] sm:$0xf]
      %v709 = vld [vmem:[%s451 + $0xc] sm:$0xf]
      %v710 = vld [vmem:[%s451 + $0x10] sm:$0xf]
      %v711 = vld [vmem:[%s451 + $0x14] sm:$0xf]
      %v712 = vld [vmem:[%s451 + $0x18] sm:$0xf]
      %v713 = vld [vmem:[%s451 + $0x1c] sm:$0xf]
      %v714 = vld [vmem:[%s451 + $0x20] sm:$0xf]
      %v715 = vld [vmem:[%s451 + $0x24] sm:$0xf]
      %v716 = vld [vmem:[%s451 + $0x28] sm:$0xf]
      %v717 = vld [vmem:[%s451 + $0x2c] sm:$0xf]
      %v718 = vld [vmem:[%s451 + $0x30] sm:$0xf]
      %v719 = vld [vmem:[%s451 + $0x34] sm:$0xf]
      %v720 = vld [vmem:[%s451 + $0x38] sm:$0xf]
      %v721 = vld [vmem:[%s451 + $0x3c] sm:$0xf]
      // Predicated region
      $region77: #{gcn_forward.1} parent=71 // pred_check
        %p722 = pneg %p458
      $region78: #{gcn_forward.1} parent=71 // pred_check_branch
        %724 = sbr.rel (%p722) target = $region80
      $region79: #{gcn_forward.1} parent=71 // pred_region
        %v725 = vld [vmem:[#allocation2] sm:$0xff]
        %v726 = vld [vmem:[#allocation2 + $0x8] sm:$0xff]
        %v727 = vld [vmem:[#allocation2 + $0x10] sm:$0xff]
        %v728 = vld [vmem:[#allocation2 + $0x18] sm:$0xff]
        %v729 = vld [vmem:[#allocation2 + $0x20] sm:$0xff]
        %v730 = vld [vmem:[#allocation2 + $0x28] sm:$0xff]
        %v731 = vld [vmem:[#allocation2 + $0x30] sm:$0xff]
        %v732 = vld [vmem:[#allocation2 + $0x38] sm:$0xff]
        %v733 = vld [vmem:[%s3] sm:$0x1]
        %v735 = vlaneseq
        %v736 = vshrl.u32 %v735, 7
        %v737 = vsub.s32 0, %v736
        %v738 = vrot.slane %v733, %v737
        %v756 = vunpack.c.l.b16 %v706
        %v757 = vunpack.c.l.b16 %v707
        %v758 = vunpack.c.l.b16 %v708
        %v759 = vunpack.c.l.b16 %v709
        %v760 = vunpack.c.l.b16 %v710
        %v761 = vunpack.c.l.b16 %v711
        %v762 = vunpack.c.l.b16 %v712
        %v763 = vunpack.c.l.b16 %v713
        %v764 = vunpack.c.l.b16 %v714
        %v765 = vunpack.c.l.b16 %v715
        %v766 = vunpack.c.l.b16 %v716
        %v767 = vunpack.c.l.b16 %v717
        %v768 = vunpack.c.l.b16 %v718
        %v769 = vunpack.c.l.b16 %v719
        %v770 = vunpack.c.l.b16 %v720
        %v771 = vunpack.c.l.b16 %v721
        %v772 = vpack.c.b16 %v757, %v756
        %v773 = vpack.c.b16 %v759, %v758
        %v774 = vpack.c.b16 %v761, %v760
        %v775 = vpack.c.b16 %v763, %v762
        %v776 = vpack.c.b16 %v765, %v764
        %v777 = vpack.c.b16 %v767, %v766
        %v778 = vpack.c.b16 %v769, %v768
        %v779 = vpack.c.b16 %v771, %v770
        %788 = vmatprep.subr.bf16.mxu0 0
        %789 = vmatpush1.bf16.msra.mxu0 %v725
        %790 = vmatprep.subr.bf16.mxu0 0
        %791 = vmatpush1.bf16.msra.mxu0 %v726
        %792 = vmatprep.subr.bf16.mxu0 0
        %793 = vmatpush1.bf16.msra.mxu0 %v727
        %794 = vmatprep.subr.bf16.mxu0 0
        %795 = vmatpush1.bf16.msra.mxu0 %v728
        %796 = vmatprep.subr.bf16.mxu0 0
        %797 = vmatpush1.bf16.msra.mxu0 %v729
        %798 = vmatprep.subr.bf16.mxu0 0
        %799 = vmatpush1.bf16.msra.mxu0 %v730
        %800 = vmatprep.subr.bf16.mxu0 0
        %801 = vmatpush1.bf16.msra.mxu0 %v731
        %802 = vmatprep.subr.bf16.mxu0 0
        %803 = vmatpush1.bf16.msra.mxu0 %v732
        %804 = vmatprep.subr.bf16.mxu0 0
        %805 = vmatpush1.bf16.msra.mxu0 0
        %806 = vmatprep.subr.bf16.mxu0 0
        %807 = vmatpush1.bf16.msra.mxu0 0
        %808 = vmatprep.subr.bf16.mxu0 0
        %809 = vmatpush1.bf16.msra.mxu0 0
        %810 = vmatprep.subr.bf16.mxu0 0
        %811 = vmatpush1.bf16.msra.mxu0 0
        %812 = vmatprep.subr.bf16.mxu0 0
        %813 = vmatpush1.bf16.msra.mxu0 0
        %814 = vmatprep.subr.bf16.mxu0 0
        %815 = vmatpush1.bf16.msra.mxu0 0
        %816 = vmatprep.subr.bf16.mxu0 0
        %817 = vmatpush1.bf16.msra.mxu0 0
        %818 = vmatprep.subr.bf16.mxu0 0
        %819 = vmatpush1.bf16.msra.mxu0 0
        %820 = vmatprep.mubr.bf16.mxu0 0
        %821 = vmatmul.mubr.bf16.gmra.mrb[0].mxu0 %v772
        %v822 = vpop.f32.mrb[0].mxu0
        %v823 = vadd.f32 %v738, %v822
        %v824 = vpop.f32.mrb[0].mxu0
        %v825 = vpop.f32.mrb[0].mxu0
        %v826 = vadd.f32 %v738, %v825
        %v827 = vpop.f32.mrb[0].mxu0
        %828 = vmatprep.mubr.bf16.mxu0 0
        %829 = vmatmul.mubr.bf16.gmra.mrb[0].mxu0 %v773
        %v830 = vpop.f32.mrb[0].mxu0
        %v831 = vadd.f32 %v738, %v830
        %v832 = vpop.f32.mrb[0].mxu0
        %v833 = vpop.f32.mrb[0].mxu0
        %v834 = vadd.f32 %v738, %v833
        %v835 = vpop.f32.mrb[0].mxu0
        %836 = vmatprep.mubr.bf16.mxu0 0
        %837 = vmatmul.mubr.bf16.gmra.mrb[0].mxu0 %v774
        %v838 = vpop.f32.mrb[0].mxu0
        %v839 = vadd.f32 %v738, %v838
        %v840 = vpop.f32.mrb[0].mxu0
        %v841 = vpop.f32.mrb[0].mxu0
        %v842 = vadd.f32 %v738, %v841
        %v843 = vpop.f32.mrb[0].mxu0
        %844 = vmatprep.mubr.bf16.mxu0 0
        %845 = vmatmul.mubr.bf16.gmra.mrb[0].mxu0 %v775
        %v846 = vpop.f32.mrb[0].mxu0
        %v847 = vadd.f32 %v738, %v846
        %v848 = vpop.f32.mrb[0].mxu0
        %v849 = vpop.f32.mrb[0].mxu0
        %v850 = vadd.f32 %v738, %v849
        %v851 = vpop.f32.mrb[0].mxu0
        %852 = vmatprep.mubr.bf16.mxu0 0
        %853 = vmatmul.mubr.bf16.gmra.mrb[0].mxu0 %v776
        %v854 = vpop.f32.mrb[0].mxu0
        %v855 = vadd.f32 %v738, %v854
        %v856 = vpop.f32.mrb[0].mxu0
        %v857 = vpop.f32.mrb[0].mxu0
        %v858 = vadd.f32 %v738, %v857
        %v859 = vpop.f32.mrb[0].mxu0
        %860 = vmatprep.mubr.bf16.mxu0 0
        %861 = vmatmul.mubr.bf16.gmra.mrb[0].mxu0 %v777
        %v862 = vpop.f32.mrb[0].mxu0
        %v863 = vadd.f32 %v738, %v862
        %v864 = vpop.f32.mrb[0].mxu0
        %v865 = vpop.f32.mrb[0].mxu0
        %v866 = vadd.f32 %v738, %v865
        %v867 = vpop.f32.mrb[0].mxu0
        %868 = vmatprep.mubr.bf16.mxu0 0
        %869 = vmatmul.mubr.bf16.gmra.mrb[0].mxu0 %v778
        %v870 = vpop.f32.mrb[0].mxu0
        %v871 = vadd.f32 %v738, %v870
        %v872 = vpop.f32.mrb[0].mxu0
        %v873 = vpop.f32.mrb[0].mxu0
        %v874 = vadd.f32 %v738, %v873
        %v875 = vpop.f32.mrb[0].mxu0
        %876 = vmatprep.mubr.bf16.mxu0 0
        %877 = vmatmul.mubr.bf16.gmra.mrb[0].mxu0 %v779
        %v878 = vpop.f32.mrb[0].mxu0
        %v879 = vadd.f32 %v738, %v878
        %v880 = vpop.f32.mrb[0].mxu0
        %v881 = vpop.f32.mrb[0].mxu0
        %v882 = vadd.f32 %v738, %v881
        %v883 = vpop.f32.mrb[0].mxu0
        %884 = vdwg.mxu0
        %v885 = vmax.f32 %v823, 0.0
        %v886 = vmax.f32 %v826, 0.0
        %v887 = vmax.f32 %v831, 0.0
        %v888 = vmax.f32 %v834, 0.0
        %v889 = vmax.f32 %v839, 0.0
        %v890 = vmax.f32 %v842, 0.0
        %v891 = vmax.f32 %v847, 0.0
        %v892 = vmax.f32 %v850, 0.0
        %v893 = vmax.f32 %v855, 0.0
        %v894 = vmax.f32 %v858, 0.0
        %v895 = vmax.f32 %v863, 0.0
        %v896 = vmax.f32 %v866, 0.0
        %v897 = vmax.f32 %v871, 0.0
        %v898 = vmax.f32 %v874, 0.0
        %v899 = vmax.f32 %v879, 0.0
        %v900 = vmax.f32 %v882, 0.0
        %s901 = smul.u32 %s29, 128
        %v902 = vpack.c.bf16 %v886, %v885
        %v903 = vpack.c.bf16 %v888, %v887
        %v904 = vpack.c.bf16 %v890, %v889
        %v905 = vpack.c.bf16 %v892, %v891
        %v906 = vpack.c.bf16 %v894, %v893
        %v907 = vpack.c.bf16 %v896, %v895
        %v908 = vpack.c.bf16 %v898, %v897
        %v909 = vpack.c.bf16 %v900, %v899
        %v910 = vld [vmem:[%s4] sm:$0xf]
        %v911 = vld [vmem:[%s4 + $0x4] sm:$0xf]
        %v912 = vld [vmem:[%s4 + $0x8] sm:$0xf]
        %v913 = vld [vmem:[%s4 + $0xc] sm:$0xf]
        %v914 = vld [vmem:[%s4 + $0x10] sm:$0xf]
        %v915 = vld [vmem:[%s4 + $0x14] sm:$0xf]
        %v916 = vld [vmem:[%s4 + $0x18] sm:$0xf]
        %v917 = vld [vmem:[%s4 + $0x1c] sm:$0xf]
        %v918 = vld [vmem:[%s4 + $0x20] sm:$0xf]
        %v919 = vld [vmem:[%s4 + $0x24] sm:$0xf]
        %v920 = vld [vmem:[%s4 + $0x28] sm:$0xf]
        %v921 = vld [vmem:[%s4 + $0x2c] sm:$0xf]
        %v922 = vld [vmem:[%s4 + $0x30] sm:$0xf]
        %v923 = vld [vmem:[%s4 + $0x34] sm:$0xf]
        %v924 = vld [vmem:[%s4 + $0x38] sm:$0xf]
        %v925 = vld [vmem:[%s4 + $0x3c] sm:$0xf]
        %v942 = vunpack.c.l.b16 %v910
        %v943 = vunpack.c.l.b16 %v911
        %v944 = vunpack.c.l.b16 %v912
        %v945 = vunpack.c.l.b16 %v913
        %v946 = vunpack.c.l.b16 %v914
        %v947 = vunpack.c.l.b16 %v915
        %v948 = vunpack.c.l.b16 %v916
        %v949 = vunpack.c.l.b16 %v917
        %v950 = vunpack.c.l.b16 %v918
        %v951 = vunpack.c.l.b16 %v919
        %v952 = vunpack.c.l.b16 %v920
        %v953 = vunpack.c.l.b16 %v921
        %v954 = vunpack.c.l.b16 %v922
        %v955 = vunpack.c.l.b16 %v923
        %v956 = vunpack.c.l.b16 %v924
        %v957 = vunpack.c.l.b16 %v925
        %v958 = vpack.c.b16 %v943, %v942
        %v959 = vpack.c.b16 %v945, %v944
        %v960 = vpack.c.b16 %v947, %v946
        %v961 = vpack.c.b16 %v949, %v948
        %v962 = vpack.c.b16 %v951, %v950
        %v963 = vpack.c.b16 %v953, %v952
        %v964 = vpack.c.b16 %v955, %v954
        %v965 = vpack.c.b16 %v957, %v956
        %974 = vmatprep.subr.bf16.mxu0 0
        %975 = vmatpush1.bf16.msra.mxu0 %v958
        %976 = vmatprep.subr.bf16.mxu0 0
        %977 = vmatpush1.bf16.msra.mxu0 %v959
        %978 = vmatprep.subr.bf16.mxu0 0
        %979 = vmatpush1.bf16.msra.mxu0 %v960
        %980 = vmatprep.subr.bf16.mxu0 0
        %981 = vmatpush1.bf16.msra.mxu0 %v961
        %982 = vmatprep.subr.bf16.mxu0 0
        %983 = vmatpush1.bf16.msra.mxu0 %v962
        %984 = vmatprep.subr.bf16.mxu0 0
        %985 = vmatpush1.bf16.msra.mxu0 %v963
        %986 = vmatprep.subr.bf16.mxu0 0
        %987 = vmatpush1.bf16.msra.mxu0 %v964
        %988 = vmatprep.subr.bf16.mxu0 0
        %989 = vmatpush1.bf16.msra.mxu0 %v965
        %990 = vmatprep.subr.bf16.mxu0 0
        %991 = vmatpush1.bf16.msra.mxu0 0
        %992 = vmatprep.subr.bf16.mxu0 0
        %993 = vmatpush1.bf16.msra.mxu0 0
        %994 = vmatprep.subr.bf16.mxu0 0
        %995 = vmatpush1.bf16.msra.mxu0 0
        %996 = vmatprep.subr.bf16.mxu0 0
        %997 = vmatpush1.bf16.msra.mxu0 0
        %998 = vmatprep.subr.bf16.mxu0 0
        %999 = vmatpush1.bf16.msra.mxu0 0
        %1000 = vmatprep.subr.bf16.mxu0 0
        %1001 = vmatpush1.bf16.msra.mxu0 0
        %1002 = vmatprep.subr.bf16.mxu0 0
        %1003 = vmatpush1.bf16.msra.mxu0 0
        %1004 = vmatprep.subr.bf16.mxu0 0
        %1005 = vmatpush1.bf16.msra.mxu0 0
        %1006 = vmatprep.mubr.bf16.mxu0 0
        %1007 = vmatmul.mubr.bf16.gmra.mrb[0].mxu0 %v902
        %v1008 = vpop.f32.mrb[0].mxu0
        %v1009 = vadd.f32 0.0, %v1008
        %v1010 = vpop.f32.mrb[0].mxu0
        %v1011 = vpop.f32.mrb[0].mxu0
        %v1012 = vadd.f32 0.0, %v1011
        %v1013 = vpop.f32.mrb[0].mxu0
        %1014 = vmatprep.mubr.bf16.mxu0 0
        %1015 = vmatmul.mubr.bf16.gmra.mrb[0].mxu0 %v903
        %v1016 = vpop.f32.mrb[0].mxu0
        %v1017 = vadd.f32 0.0, %v1016
        %v1018 = vpop.f32.mrb[0].mxu0
        %v1019 = vpop.f32.mrb[0].mxu0
        %v1020 = vadd.f32 0.0, %v1019
        %v1021 = vpop.f32.mrb[0].mxu0
        %1022 = vmatprep.mubr.bf16.mxu0 0
        %1023 = vmatmul.mubr.bf16.gmra.mrb[0].mxu0 %v904
        %v1024 = vpop.f32.mrb[0].mxu0
        %v1025 = vadd.f32 0.0, %v1024
        %v1026 = vpop.f32.mrb[0].mxu0
        %v1027 = vpop.f32.mrb[0].mxu0
        %v1028 = vadd.f32 0.0, %v1027
        %v1029 = vpop.f32.mrb[0].mxu0
        %1030 = vmatprep.mubr.bf16.mxu0 0
        %1031 = vmatmul.mubr.bf16.gmra.mrb[0].mxu0 %v905
        %v1032 = vpop.f32.mrb[0].mxu0
        %v1033 = vadd.f32 0.0, %v1032
        %v1034 = vpop.f32.mrb[0].mxu0
        %v1035 = vpop.f32.mrb[0].mxu0
        %v1036 = vadd.f32 0.0, %v1035
        %v1037 = vpop.f32.mrb[0].mxu0
        %1038 = vmatprep.mubr.bf16.mxu0 0
        %1039 = vmatmul.mubr.bf16.gmra.mrb[0].mxu0 %v906
        %v1040 = vpop.f32.mrb[0].mxu0
        %v1041 = vadd.f32 0.0, %v1040
        %v1042 = vpop.f32.mrb[0].mxu0
        %v1043 = vpop.f32.mrb[0].mxu0
        %v1044 = vadd.f32 0.0, %v1043
        %v1045 = vpop.f32.mrb[0].mxu0
        %1046 = vmatprep.mubr.bf16.mxu0 0
        %1047 = vmatmul.mubr.bf16.gmra.mrb[0].mxu0 %v907
        %v1048 = vpop.f32.mrb[0].mxu0
        %v1049 = vadd.f32 0.0, %v1048
        %v1050 = vpop.f32.mrb[0].mxu0
        %v1051 = vpop.f32.mrb[0].mxu0
        %v1052 = vadd.f32 0.0, %v1051
        %v1053 = vpop.f32.mrb[0].mxu0
        %1054 = vmatprep.mubr.bf16.mxu0 0
        %1055 = vmatmul.mubr.bf16.gmra.mrb[0].mxu0 %v908
        %v1056 = vpop.f32.mrb[0].mxu0
        %v1057 = vadd.f32 0.0, %v1056
        %v1058 = vpop.f32.mrb[0].mxu0
        %v1059 = vpop.f32.mrb[0].mxu0
        %v1060 = vadd.f32 0.0, %v1059
        %v1061 = vpop.f32.mrb[0].mxu0
        %1062 = vmatprep.mubr.bf16.mxu0 0
        %1063 = vmatmul.mubr.bf16.gmra.mrb[0].mxu0 %v909
        %v1064 = vpop.f32.mrb[0].mxu0
        %v1065 = vadd.f32 0.0, %v1064
        %v1066 = vpop.f32.mrb[0].mxu0
        %v1067 = vpop.f32.mrb[0].mxu0
        %v1068 = vadd.f32 0.0, %v1067
        %v1069 = vpop.f32.mrb[0].mxu0
        %1070 = vdwg.mxu0
        %v1071 = vpack.c.bf16 %v1012, %v1009
        %v1072 = vpack.c.bf16 %v1020, %v1017
        %v1073 = vpack.c.bf16 %v1028, %v1025
        %v1074 = vpack.c.bf16 %v1036, %v1033
        %v1075 = vpack.c.bf16 %v1044, %v1041
        %v1076 = vpack.c.bf16 %v1052, %v1049
        %v1077 = vpack.c.bf16 %v1060, %v1057
        %v1078 = vpack.c.bf16 %v1068, %v1065
        %s1079 = sshra.s32 %s901, 4
        %s1080 = sand.u32 %s901, 15
        %s1081 = smul.addr %s1079, 8
        %s1082 = scalar_lea.vmem [#allocation3], %s1081
        %1083 = vst [vmem:[%s1082] sm:$0xff] %v1071
        %1084 = vst [vmem:[%s1082 + $0x8] sm:$0xff] %v1072
        %1085 = vst [vmem:[%s1082 + $0x10] sm:$0xff] %v1073
        %1086 = vst [vmem:[%s1082 + $0x18] sm:$0xff] %v1074
        %1087 = vst [vmem:[%s1082 + $0x20] sm:$0xff] %v1075
        %1088 = vst [vmem:[%s1082 + $0x28] sm:$0xff] %v1076
        %1089 = vst [vmem:[%s1082 + $0x30] sm:$0xff] %v1077
        %1090 = vst [vmem:[%s1082 + $0x38] sm:$0xff] %v1078
      $region80: #{gcn_forward.1} parent=71 // pred_fallthru
        _
      %p1091 = scmp.eq.s32.totalorder %s28, 1
      // Predicated region
      $region81: #{gcn_forward.1} parent=71 // pred_check
        %p1092 = pneg %p1091
      $region82: #{gcn_forward.1} parent=71 // pred_check_branch
        %1094 = sbr.rel (%p1092) target = $region84
      $region83: #{gcn_forward.1} parent=71 // pred_region
        %v1095 = vld [vmem:[#allocation3] sm:$0xff]
        %v1096 = vld [vmem:[#allocation3 + $0x8] sm:$0xff]
        %v1097 = vld [vmem:[#allocation3 + $0x10] sm:$0xff]
        %v1098 = vld [vmem:[#allocation3 + $0x18] sm:$0xff]
        %v1099 = vld [vmem:[#allocation3 + $0x20] sm:$0xff]
        %v1100 = vld [vmem:[#allocation3 + $0x28] sm:$0xff]
        %v1101 = vld [vmem:[#allocation3 + $0x30] sm:$0xff]
        %v1102 = vld [vmem:[#allocation3 + $0x38] sm:$0xff]
        %v1103 = vld [vmem:[%s5] sm:$0x1]
        %v1105 = vlaneseq
        %v1106 = vshrl.u32 %v1105, 7
        %v1107 = vsub.s32 0, %v1106
        %v1108 = vrot.slane %v1103, %v1107
        %v1126 = vunpack.c.l.b16 %v706
        %v1127 = vunpack.c.l.b16 %v707
        %v1128 = vunpack.c.l.b16 %v708
        %v1129 = vunpack.c.l.b16 %v709
        %v1130 = vunpack.c.l.b16 %v710
        %v1131 = vunpack.c.l.b16 %v711
        %v1132 = vunpack.c.l.b16 %v712
        %v1133 = vunpack.c.l.b16 %v713
        %v1134 = vunpack.c.l.b16 %v714
        %v1135 = vunpack.c.l.b16 %v715
        %v1136 = vunpack.c.l.b16 %v716
        %v1137 = vunpack.c.l.b16 %v717
        %v1138 = vunpack.c.l.b16 %v718
        %v1139 = vunpack.c.l.b16 %v719
        %v1140 = vunpack.c.l.b16 %v720
        %v1141 = vunpack.c.l.b16 %v721
        %v1142 = vpack.c.b16 %v1127, %v1126
        %v1143 = vpack.c.b16 %v1129, %v1128
        %v1144 = vpack.c.b16 %v1131, %v1130
        %v1145 = vpack.c.b16 %v1133, %v1132
        %v1146 = vpack.c.b16 %v1135, %v1134
        %v1147 = vpack.c.b16 %v1137, %v1136
        %v1148 = vpack.c.b16 %v1139, %v1138
        %v1149 = vpack.c.b16 %v1141, %v1140
        %1158 = vmatprep.subr.bf16.mxu0 0
        %1159 = vmatpush1.bf16.msra.mxu0 %v1095
        %1160 = vmatprep.subr.bf16.mxu0 0
        %1161 = vmatpush1.bf16.msra.mxu0 %v1096
        %1162 = vmatprep.subr.bf16.mxu0 0
        %1163 = vmatpush1.bf16.msra.mxu0 %v1097
        %1164 = vmatprep.subr.bf16.mxu0 0
        %1165 = vmatpush1.bf16.msra.mxu0 %v1098
        %1166 = vmatprep.subr.bf16.mxu0 0
        %1167 = vmatpush1.bf16.msra.mxu0 %v1099
        %1168 = vmatprep.subr.bf16.mxu0 0
        %1169 = vmatpush1.bf16.msra.mxu0 %v1100
        %1170 = vmatprep.subr.bf16.mxu0 0
        %1171 = vmatpush1.bf16.msra.mxu0 %v1101
        %1172 = vmatprep.subr.bf16.mxu0 0
        %1173 = vmatpush1.bf16.msra.mxu0 %v1102
        %1174 = vmatprep.subr.bf16.mxu0 0
        %1175 = vmatpush1.bf16.msra.mxu0 0
        %1176 = vmatprep.subr.bf16.mxu0 0
        %1177 = vmatpush1.bf16.msra.mxu0 0
        %1178 = vmatprep.subr.bf16.mxu0 0
        %1179 = vmatpush1.bf16.msra.mxu0 0
        %1180 = vmatprep.subr.bf16.mxu0 0
        %1181 = vmatpush1.bf16.msra.mxu0 0
        %1182 = vmatprep.subr.bf16.mxu0 0
        %1183 = vmatpush1.bf16.msra.mxu0 0
        %1184 = vmatprep.subr.bf16.mxu0 0
        %1185 = vmatpush1.bf16.msra.mxu0 0
        %1186 = vmatprep.subr.bf16.mxu0 0
        %1187 = vmatpush1.bf16.msra.mxu0 0
        %1188 = vmatprep.subr.bf16.mxu0 0
        %1189 = vmatpush1.bf16.msra.mxu0 0
        %1190 = vmatprep.mubr.bf16.mxu0 0
        %1191 = vmatmul.mubr.bf16.gmra.mrb[0].mxu0 %v1142
        %v1192 = vpop.f32.mrb[0].mxu0
        %v1193 = vadd.f32 %v1108, %v1192
        %v1194 = vpop.f32.mrb[0].mxu0
        %v1195 = vpop.f32.mrb[0].mxu0
        %v1196 = vadd.f32 %v1108, %v1195
        %v1197 = vpop.f32.mrb[0].mxu0
        %1198 = vmatprep.mubr.bf16.mxu0 0
        %1199 = vmatmul.mubr.bf16.gmra.mrb[0].mxu0 %v1143
        %v1200 = vpop.f32.mrb[0].mxu0
        %v1201 = vadd.f32 %v1108, %v1200
        %v1202 = vpop.f32.mrb[0].mxu0
        %v1203 = vpop.f32.mrb[0].mxu0
        %v1204 = vadd.f32 %v1108, %v1203
        %v1205 = vpop.f32.mrb[0].mxu0
        %1206 = vmatprep.mubr.bf16.mxu0 0
        %1207 = vmatmul.mubr.bf16.gmra.mrb[0].mxu0 %v1144
        %v1208 = vpop.f32.mrb[0].mxu0
        %v1209 = vadd.f32 %v1108, %v1208
        %v1210 = vpop.f32.mrb[0].mxu0
        %v1211 = vpop.f32.mrb[0].mxu0
        %v1212 = vadd.f32 %v1108, %v1211
        %v1213 = vpop.f32.mrb[0].mxu0
        %1214 = vmatprep.mubr.bf16.mxu0 0
        %1215 = vmatmul.mubr.bf16.gmra.mrb[0].mxu0 %v1145
        %v1216 = vpop.f32.mrb[0].mxu0
        %v1217 = vadd.f32 %v1108, %v1216
        %v1218 = vpop.f32.mrb[0].mxu0
        %v1219 = vpop.f32.mrb[0].mxu0
        %v1220 = vadd.f32 %v1108, %v1219
        %v1221 = vpop.f32.mrb[0].mxu0
        %1222 = vmatprep.mubr.bf16.mxu0 0
        %1223 = vmatmul.mubr.bf16.gmra.mrb[0].mxu0 %v1146
        %v1224 = vpop.f32.mrb[0].mxu0
        %v1225 = vadd.f32 %v1108, %v1224
        %v1226 = vpop.f32.mrb[0].mxu0
        %v1227 = vpop.f32.mrb[0].mxu0
        %v1228 = vadd.f32 %v1108, %v1227
        %v1229 = vpop.f32.mrb[0].mxu0
        %1230 = vmatprep.mubr.bf16.mxu0 0
        %1231 = vmatmul.mubr.bf16.gmra.mrb[0].mxu0 %v1147
        %v1232 = vpop.f32.mrb[0].mxu0
        %v1233 = vadd.f32 %v1108, %v1232
        %v1234 = vpop.f32.mrb[0].mxu0
        %v1235 = vpop.f32.mrb[0].mxu0
        %v1236 = vadd.f32 %v1108, %v1235
        %v1237 = vpop.f32.mrb[0].mxu0
        %1238 = vmatprep.mubr.bf16.mxu0 0
        %1239 = vmatmul.mubr.bf16.gmra.mrb[0].mxu0 %v1148
        %v1240 = vpop.f32.mrb[0].mxu0
        %v1241 = vadd.f32 %v1108, %v1240
        %v1242 = vpop.f32.mrb[0].mxu0
        %v1243 = vpop.f32.mrb[0].mxu0
        %v1244 = vadd.f32 %v1108, %v1243
        %v1245 = vpop.f32.mrb[0].mxu0
        %1246 = vmatprep.mubr.bf16.mxu0 0
        %1247 = vmatmul.mubr.bf16.gmra.mrb[0].mxu0 %v1149
        %v1248 = vpop.f32.mrb[0].mxu0
        %v1249 = vadd.f32 %v1108, %v1248
        %v1250 = vpop.f32.mrb[0].mxu0
        %v1251 = vpop.f32.mrb[0].mxu0
        %v1252 = vadd.f32 %v1108, %v1251
        %v1253 = vpop.f32.mrb[0].mxu0
        %1254 = vdwg.mxu0
        %v1255 = vmax.f32 %v1193, 0.0
        %v1256 = vmax.f32 %v1196, 0.0
        %v1257 = vmax.f32 %v1201, 0.0
        %v1258 = vmax.f32 %v1204, 0.0
        %v1259 = vmax.f32 %v1209, 0.0
        %v1260 = vmax.f32 %v1212, 0.0
        %v1261 = vmax.f32 %v1217, 0.0
        %v1262 = vmax.f32 %v1220, 0.0
        %v1263 = vmax.f32 %v1225, 0.0
        %v1264 = vmax.f32 %v1228, 0.0
        %v1265 = vmax.f32 %v1233, 0.0
        %v1266 = vmax.f32 %v1236, 0.0
        %v1267 = vmax.f32 %v1241, 0.0
        %v1268 = vmax.f32 %v1244, 0.0
        %v1269 = vmax.f32 %v1249, 0.0
        %v1270 = vmax.f32 %v1252, 0.0
        %v1271 = vld [vmem:[#allocation4] sm:$0xff]
        %v1272 = vld [vmem:[%s456] sm:$0xff]
        %1273 = vmatprep.subr.mxu0 0.0
        %1274 = vmatpush1.msra.mxu0 %v1255
        %1275 = vmatprep.subr.mxu0 0.0
        %1276 = vmatpush1.msra.mxu0 %v1256
        %1277 = vmatprep.subr.mxu0 0.0
        %1278 = vmatpush1.msra.mxu0 %v1257
        %1279 = vmatprep.subr.mxu0 0.0
        %1280 = vmatpush1.msra.mxu0 %v1258
        %1281 = vmatprep.subr.mxu0 0.0
        %1282 = vmatpush1.msra.mxu0 %v1259
        %1283 = vmatprep.subr.mxu0 0.0
        %1284 = vmatpush1.msra.mxu0 %v1260
        %1285 = vmatprep.subr.mxu0 0.0
        %1286 = vmatpush1.msra.mxu0 %v1261
        %1287 = vmatprep.subr.mxu0 0.0
        %1288 = vmatpush1.msra.mxu0 %v1262
        %1289 = vmatprep.subr.mxu0 0.0
        %1290 = vmatpush1.msra.mxu0 %v1263
        %1291 = vmatprep.subr.mxu0 0.0
        %1292 = vmatpush1.msra.mxu0 %v1264
        %1293 = vmatprep.subr.mxu0 0.0
        %1294 = vmatpush1.msra.mxu0 %v1265
        %1295 = vmatprep.subr.mxu0 0.0
        %1296 = vmatpush1.msra.mxu0 %v1266
        %1297 = vmatprep.subr.mxu0 0.0
        %1298 = vmatpush1.msra.mxu0 %v1267
        %1299 = vmatprep.subr.mxu0 0.0
        %1300 = vmatpush1.msra.mxu0 %v1268
        %1301 = vmatprep.subr.mxu0 0.0
        %1302 = vmatpush1.msra.mxu0 %v1269
        %1303 = vmatprep.subr.mxu0 0.0
        %1304 = vmatpush1.msra.mxu0 %v1270
        %1305 = vmatprep.subr.mxu0 0.0
        %1306 = vmatpush1.msra.mxu0 0.0
        %1307 = vmatprep.subr.mxu0 0.0
        %1308 = vmatpush1.msra.mxu0 0.0
        %1309 = vmatprep.subr.mxu0 0.0
        %1310 = vmatpush1.msra.mxu0 0.0
        %1311 = vmatprep.subr.mxu0 0.0
        %1312 = vmatpush1.msra.mxu0 0.0
        %1313 = vmatprep.subr.mxu0 0.0
        %1314 = vmatpush1.msra.mxu0 0.0
        %1315 = vmatprep.subr.mxu0 0.0
        %1316 = vmatpush1.msra.mxu0 0.0
        %1317 = vmatprep.subr.mxu0 0.0
        %1318 = vmatpush1.msra.mxu0 0.0
        %1319 = vmatprep.subr.mxu0 0.0
        %1320 = vmatpush1.msra.mxu0 0.0
        %1321 = vmatprep.subr.mxu0 0.0
        %1322 = vmatpush1.msra.mxu0 0.0
        %1323 = vmatprep.subr.mxu0 0.0
        %1324 = vmatpush1.msra.mxu0 0.0
        %1325 = vmatprep.subr.mxu0 0.0
        %1326 = vmatpush1.msra.mxu0 0.0
        %1327 = vmatprep.subr.mxu0 0.0
        %1328 = vmatpush1.msra.mxu0 0.0
        %1329 = vmatprep.subr.mxu0 0.0
        %1330 = vmatpush1.msra.mxu0 0.0
        %1331 = vmatprep.subr.mxu0 0.0
        %1332 = vmatpush1.msra.mxu0 0.0
        %1333 = vmatprep.subr.mxu0 0.0
        %1334 = vmatpush1.msra.mxu0 0.0
        %1335 = vmatprep.subr.mxu0 0.0
        %1336 = vmatpush1.msra.mxu0 0.0
        %1337 = vmatprep.mubr.f32.mxu0 0.0
        %1338 = vmatmul.mubr.f32.gmra.mrb[0].mxu0 %v1272
        %v1339 = vpop.f32.mrb[0].mxu0
        %v1340 = vadd.f32 0.0, %v1339
        %v1341 = vpop.f32.mrb[0].mxu0
        %1342 = vdwg.mxu0
        %v1343 = vadd.f32 %v1271, %v1340
        %1344 = vst [vmem:[#allocation4] sm:$0xff] %v1343
      $region84: #{gcn_forward.1} parent=71 // pred_fallthru
        _
      %p1345 = pnand %p1091, %p459
      %p1346 = pneg %p1345
      // Predicated region
      $region85: #{gcn_forward.1} parent=71 // pred_check
        _
      $region86: #{gcn_forward.1} parent=71 // pred_check_branch
        %1348 = sbr.rel (%p1345) target = $region88
      $region87: #{gcn_forward.1} parent=71 // pred_region
        %v1349 = vld [vmem:[%s7] sm:$0xf]
        %v1350 = vld [vmem:[%s8] sm:$0xf]
        %v1351 = vld [vmem:[%s8 + $0x4] sm:$0xf]
        %v1352 = vld [vmem:[%s8 + $0x8] sm:$0xf]
        %v1353 = vld [vmem:[%s8 + $0xc] sm:$0xf]
        %v1354 = vld [vmem:[%s8 + $0x10] sm:$0xf]
        %v1355 = vld [vmem:[%s8 + $0x14] sm:$0xf]
        %v1356 = vld [vmem:[%s8 + $0x18] sm:$0xf]
        %v1357 = vld [vmem:[%s8 + $0x1c] sm:$0xf]
        %v1358 = vld [vmem:[%s8 + $0x20] sm:$0xf]
        %v1359 = vld [vmem:[%s8 + $0x24] sm:$0xf]
        %v1360 = vld [vmem:[%s8 + $0x28] sm:$0xf]
        %v1361 = vld [vmem:[%s8 + $0x2c] sm:$0xf]
        %v1362 = vld [vmem:[%s8 + $0x30] sm:$0xf]
        %v1363 = vld [vmem:[%s8 + $0x34] sm:$0xf]
        %v1364 = vld [vmem:[%s8 + $0x38] sm:$0xf]
        %v1365 = vld [vmem:[%s8 + $0x3c] sm:$0xf]
        %v1366 = vld [vmem:[%s9] sm:$0x1]
        %v1368 = vlaneseq
        %v1369 = vshrl.u32 %v1368, 7
        %v1370 = vsub.s32 0, %v1369
        %v1371 = vrot.slane %v1366, %v1370
        %v1389 = vunpack.c.l.b16 %v1350
        %v1390 = vunpack.c.l.b16 %v1351
        %v1391 = vunpack.c.l.b16 %v1352
        %v1392 = vunpack.c.l.b16 %v1353
        %v1393 = vunpack.c.l.b16 %v1354
        %v1394 = vunpack.c.l.b16 %v1355
        %v1395 = vunpack.c.l.b16 %v1356
        %v1396 = vunpack.c.l.b16 %v1357
        %v1397 = vunpack.c.l.b16 %v1358
        %v1398 = vunpack.c.l.b16 %v1359
        %v1399 = vunpack.c.l.b16 %v1360
        %v1400 = vunpack.c.l.b16 %v1361
        %v1401 = vunpack.c.l.b16 %v1362
        %v1402 = vunpack.c.l.b16 %v1363
        %v1403 = vunpack.c.l.b16 %v1364
        %v1404 = vunpack.c.l.b16 %v1365
        %v1405 = vpack.c.b16 %v1390, %v1389
        %v1406 = vpack.c.b16 %v1392, %v1391
        %v1407 = vpack.c.b16 %v1394, %v1393
        %v1408 = vpack.c.b16 %v1396, %v1395
        %v1409 = vpack.c.b16 %v1398, %v1397
        %v1410 = vpack.c.b16 %v1400, %v1399
        %v1411 = vpack.c.b16 %v1402, %v1401
        %v1412 = vpack.c.b16 %v1404, %v1403
        %1421 = vmatprep.subr.bf16.mxu0 0
        %1422 = vmatpush1.bf16.msra.mxu0 %v1405
        %1423 = vmatprep.subr.bf16.mxu0 0
        %1424 = vmatpush1.bf16.msra.mxu0 %v1406
        %1425 = vmatprep.subr.bf16.mxu0 0
        %1426 = vmatpush1.bf16.msra.mxu0 %v1407
        %1427 = vmatprep.subr.bf16.mxu0 0
        %1428 = vmatpush1.bf16.msra.mxu0 %v1408
        %1429 = vmatprep.subr.bf16.mxu0 0
        %1430 = vmatpush1.bf16.msra.mxu0 %v1409
        %1431 = vmatprep.subr.bf16.mxu0 0
        %1432 = vmatpush1.bf16.msra.mxu0 %v1410
        %1433 = vmatprep.subr.bf16.mxu0 0
        %1434 = vmatpush1.bf16.msra.mxu0 %v1411
        %1435 = vmatprep.subr.bf16.mxu0 0
        %1436 = vmatpush1.bf16.msra.mxu0 %v1412
        %1437 = vmatprep.subr.bf16.mxu0 0
        %1438 = vmatpush1.bf16.msra.mxu0 0
        %1439 = vmatprep.subr.bf16.mxu0 0
        %1440 = vmatpush1.bf16.msra.mxu0 0
        %1441 = vmatprep.subr.bf16.mxu0 0
        %1442 = vmatpush1.bf16.msra.mxu0 0
        %1443 = vmatprep.subr.bf16.mxu0 0
        %1444 = vmatpush1.bf16.msra.mxu0 0
        %1445 = vmatprep.subr.bf16.mxu0 0
        %1446 = vmatpush1.bf16.msra.mxu0 0
        %1447 = vmatprep.subr.bf16.mxu0 0
        %1448 = vmatpush1.bf16.msra.mxu0 0
        %1449 = vmatprep.subr.bf16.mxu0 0
        %1450 = vmatpush1.bf16.msra.mxu0 0
        %1451 = vmatprep.subr.bf16.mxu0 0
        %1452 = vmatpush1.bf16.msra.mxu0 0
        %1453 = vmatprep.mubr.bf16.mxu0 0
        %1454 = vmatmul.mubr.bf16.gmra.mrb[0].mxu0 %v1349
        %v1455 = vpop.f32.mrb[0].mxu0
        %v1456 = vadd.f32 %v1371, %v1455
        %v1457 = vpop.f32.mrb[0].mxu0
        %v1458 = vpop.f32.mrb[0].mxu0
        %v1459 = vpop.f32.mrb[0].mxu0
        %1460 = vdwg.mxu0
        %v1461 = vmax.f32 %v1456, 0.0
        %v1462 = vld [vmem:[#allocation4] sm:$0xff]
        %v1463 = vpack.c.bf16 %v1462, %v1462
        %v1464 = vld [vmem:[%s10] sm:$0xf]
        %v1465 = vld [vmem:[%s10 + $0x4] sm:$0xf]
        %v1466 = vld [vmem:[%s10 + $0x8] sm:$0xf]
        %v1467 = vld [vmem:[%s10 + $0xc] sm:$0xf]
        %v1468 = vld [vmem:[%s10 + $0x10] sm:$0xf]
        %v1469 = vld [vmem:[%s10 + $0x14] sm:$0xf]
        %v1470 = vld [vmem:[%s10 + $0x18] sm:$0xf]
        %v1471 = vld [vmem:[%s10 + $0x1c] sm:$0xf]
        %v1472 = vld [vmem:[%s10 + $0x20] sm:$0xf]
        %v1473 = vld [vmem:[%s10 + $0x24] sm:$0xf]
        %v1474 = vld [vmem:[%s10 + $0x28] sm:$0xf]
        %v1475 = vld [vmem:[%s10 + $0x2c] sm:$0xf]
        %v1476 = vld [vmem:[%s10 + $0x30] sm:$0xf]
        %v1477 = vld [vmem:[%s10 + $0x34] sm:$0xf]
        %v1478 = vld [vmem:[%s10 + $0x38] sm:$0xf]
        %v1479 = vld [vmem:[%s10 + $0x3c] sm:$0xf]
        %v1480 = vpack.c.bf16 %v1461, %v1461
        %v1481 = vld [vmem:[%s11] sm:$0xf]
        %v1482 = vld [vmem:[%s11 + $0x4] sm:$0xf]
        %v1483 = vld [vmem:[%s11 + $0x8] sm:$0xf]
        %v1484 = vld [vmem:[%s11 + $0xc] sm:$0xf]
        %v1485 = vld [vmem:[%s11 + $0x10] sm:$0xf]
        %v1486 = vld [vmem:[%s11 + $0x14] sm:$0xf]
        %v1487 = vld [vmem:[%s11 + $0x18] sm:$0xf]
        %v1488 = vld [vmem:[%s11 + $0x1c] sm:$0xf]
        %v1489 = vld [vmem:[%s11 + $0x20] sm:$0xf]
        %v1490 = vld [vmem:[%s11 + $0x24] sm:$0xf]
        %v1491 = vld [vmem:[%s11 + $0x28] sm:$0xf]
        %v1492 = vld [vmem:[%s11 + $0x2c] sm:$0xf]
        %v1493 = vld [vmem:[%s11 + $0x30] sm:$0xf]
        %v1494 = vld [vmem:[%s11 + $0x34] sm:$0xf]
        %v1495 = vld [vmem:[%s11 + $0x38] sm:$0xf]
        %v1496 = vld [vmem:[%s11 + $0x3c] sm:$0xf]
        %v1513 = vunpack.c.l.b16 %v1481
        %v1514 = vunpack.c.l.b16 %v1482
        %v1515 = vunpack.c.l.b16 %v1483
        %v1516 = vunpack.c.l.b16 %v1484
        %v1517 = vunpack.c.l.b16 %v1485
        %v1518 = vunpack.c.l.b16 %v1486
        %v1519 = vunpack.c.l.b16 %v1487
        %v1520 = vunpack.c.l.b16 %v1488
        %v1521 = vunpack.c.l.b16 %v1489
        %v1522 = vunpack.c.l.b16 %v1490
        %v1523 = vunpack.c.l.b16 %v1491
        %v1524 = vunpack.c.l.b16 %v1492
        %v1525 = vunpack.c.l.b16 %v1493
        %v1526 = vunpack.c.l.b16 %v1494
        %v1527 = vunpack.c.l.b16 %v1495
        %v1528 = vunpack.c.l.b16 %v1496
        %v1529 = vpack.c.b16 %v1514, %v1513
        %v1530 = vpack.c.b16 %v1516, %v1515
        %v1531 = vpack.c.b16 %v1518, %v1517
        %v1532 = vpack.c.b16 %v1520, %v1519
        %v1533 = vpack.c.b16 %v1522, %v1521
        %v1534 = vpack.c.b16 %v1524, %v1523
        %v1535 = vpack.c.b16 %v1526, %v1525
        %v1536 = vpack.c.b16 %v1528, %v1527
        %1545 = vmatprep.subr.bf16.mxu0 0
        %1546 = vmatpush1.bf16.msra.mxu0 %v1529
        %1547 = vmatprep.subr.bf16.mxu0 0
        %1548 = vmatpush1.bf16.msra.mxu0 %v1530
        %1549 = vmatprep.subr.bf16.mxu0 0
        %1550 = vmatpush1.bf16.msra.mxu0 %v1531
        %1551 = vmatprep.subr.bf16.mxu0 0
        %1552 = vmatpush1.bf16.msra.mxu0 %v1532
        %1553 = vmatprep.subr.bf16.mxu0 0
        %1554 = vmatpush1.bf16.msra.mxu0 %v1533
        %1555 = vmatprep.subr.bf16.mxu0 0
        %1556 = vmatpush1.bf16.msra.mxu0 %v1534
        %1557 = vmatprep.subr.bf16.mxu0 0
        %1558 = vmatpush1.bf16.msra.mxu0 %v1535
        %1559 = vmatprep.subr.bf16.mxu0 0
        %1560 = vmatpush1.bf16.msra.mxu0 %v1536
        %1561 = vmatprep.subr.bf16.mxu0 0
        %1562 = vmatpush1.bf16.msra.mxu0 0
        %1563 = vmatprep.subr.bf16.mxu0 0
        %1564 = vmatpush1.bf16.msra.mxu0 0
        %1565 = vmatprep.subr.bf16.mxu0 0
        %1566 = vmatpush1.bf16.msra.mxu0 0
        %1567 = vmatprep.subr.bf16.mxu0 0
        %1568 = vmatpush1.bf16.msra.mxu0 0
        %1569 = vmatprep.subr.bf16.mxu0 0
        %1570 = vmatpush1.bf16.msra.mxu0 0
        %1571 = vmatprep.subr.bf16.mxu0 0
        %1572 = vmatpush1.bf16.msra.mxu0 0
        %1573 = vmatprep.subr.bf16.mxu0 0
        %1574 = vmatpush1.bf16.msra.mxu0 0
        %1575 = vmatprep.subr.bf16.mxu0 0
        %1576 = vmatpush1.bf16.msra.mxu0 0
        %1577 = vmatprep.mubr.bf16.mxu0 0
        %1578 = vmatmul.mubr.bf16.gmra.mrb[0].mxu0 %v1480
        %v1579 = vpop.f32.mrb[0].mxu0
        %v1580 = vadd.f32 0.0, %v1579
        %v1581 = vpop.f32.mrb[0].mxu0
        %v1582 = vpop.f32.mrb[0].mxu0
        %v1583 = vpop.f32.mrb[0].mxu0
        %1584 = vdwg.mxu0
        %v1601 = vunpack.c.l.b16 %v1464
        %v1602 = vunpack.c.l.b16 %v1465
        %v1603 = vunpack.c.l.b16 %v1466
        %v1604 = vunpack.c.l.b16 %v1467
        %v1605 = vunpack.c.l.b16 %v1468
        %v1606 = vunpack.c.l.b16 %v1469
        %v1607 = vunpack.c.l.b16 %v1470
        %v1608 = vunpack.c.l.b16 %v1471
        %v1609 = vunpack.c.l.b16 %v1472
        %v1610 = vunpack.c.l.b16 %v1473
        %v1611 = vunpack.c.l.b16 %v1474
        %v1612 = vunpack.c.l.b16 %v1475
        %v1613 = vunpack.c.l.b16 %v1476
        %v1614 = vunpack.c.l.b16 %v1477
        %v1615 = vunpack.c.l.b16 %v1478
        %v1616 = vunpack.c.l.b16 %v1479
        %v1617 = vpack.c.b16 %v1602, %v1601
        %v1618 = vpack.c.b16 %v1604, %v1603
        %v1619 = vpack.c.b16 %v1606, %v1605
        %v1620 = vpack.c.b16 %v1608, %v1607
        %v1621 = vpack.c.b16 %v1610, %v1609
        %v1622 = vpack.c.b16 %v1612, %v1611
        %v1623 = vpack.c.b16 %v1614, %v1613
        %v1624 = vpack.c.b16 %v1616, %v1615
        %1633 = vmatprep.subr.bf16.mxu0 0
        %1634 = vmatpush1.bf16.msra.mxu0 %v1617
        %1635 = vmatprep.subr.bf16.mxu0 0
        %1636 = vmatpush1.bf16.msra.mxu0 %v1618
        %1637 = vmatprep.subr.bf16.mxu0 0
        %1638 = vmatpush1.bf16.msra.mxu0 %v1619
        %1639 = vmatprep.subr.bf16.mxu0 0
        %1640 = vmatpush1.bf16.msra.mxu0 %v1620
        %1641 = vmatprep.subr.bf16.mxu0 0
        %1642 = vmatpush1.bf16.msra.mxu0 %v1621
        %1643 = vmatprep.subr.bf16.mxu0 0
        %1644 = vmatpush1.bf16.msra.mxu0 %v1622
        %1645 = vmatprep.subr.bf16.mxu0 0
        %1646 = vmatpush1.bf16.msra.mxu0 %v1623
        %1647 = vmatprep.subr.bf16.mxu0 0
        %1648 = vmatpush1.bf16.msra.mxu0 %v1624
        %1649 = vmatprep.subr.bf16.mxu0 0
        %1650 = vmatpush1.bf16.msra.mxu0 0
        %1651 = vmatprep.subr.bf16.mxu0 0
        %1652 = vmatpush1.bf16.msra.mxu0 0
        %1653 = vmatprep.subr.bf16.mxu0 0
        %1654 = vmatpush1.bf16.msra.mxu0 0
        %1655 = vmatprep.subr.bf16.mxu0 0
        %1656 = vmatpush1.bf16.msra.mxu0 0
        %1657 = vmatprep.subr.bf16.mxu0 0
        %1658 = vmatpush1.bf16.msra.mxu0 0
        %1659 = vmatprep.subr.bf16.mxu0 0
        %1660 = vmatpush1.bf16.msra.mxu0 0
        %1661 = vmatprep.subr.bf16.mxu0 0
        %1662 = vmatpush1.bf16.msra.mxu0 0
        %1663 = vmatprep.subr.bf16.mxu0 0
        %1664 = vmatpush1.bf16.msra.mxu0 0
        %1665 = vmatprep.mubr.bf16.mxu0 0
        %1666 = vmatmul.mubr.bf16.gmra.mrb[0].mxu0 %v1463
        %v1667 = vpop.f32.mrb[0].mxu0
        %v1668 = vadd.f32 %v1580, %v1667
        %v1669 = vpop.f32.mrb[0].mxu0
        %v1670 = vpop.f32.mrb[0].mxu0
        %v1671 = vpop.f32.mrb[0].mxu0
        %1672 = vdwg.mxu0
        %v1673 = vld [vmem:[%s12] sm:$0x1]
        %v1675 = vlaneseq
        %v1676 = vshrl.u32 %v1675, 7
        %v1677 = vsub.s32 0, %v1676
        %v1678 = vrot.slane %v1673, %v1677
        %v1680 = vadd.f32 %v1668, %v1678
        %1681 = vst [vmem:[%s13] sm:$0xff] %v1680
      $region88: #{gcn_forward.1} parent=71 // pred_fallthru
        _
      // Predicated region
      $region89: #{gcn_forward.1} parent=71 // pred_check
        %p1682 = pneg %p332
      $region90: #{gcn_forward.1} parent=71 // pred_check_branch
        %1684 = sbr.rel (%p1682) target = $region92
      $region91: #{gcn_forward.1} parent=71 // pred_region
        _
      $region92: #{gcn_forward.1} parent=71 // pred_fallthru
        _
      // Predicated region
      $region93: #{gcn_forward.1} parent=71 // pred_check
        %p1685 = pneg %p332
      $region94: #{gcn_forward.1} parent=71 // pred_check_branch
        %1687 = sbr.rel (%p1685) target = $region96
      $region95: #{gcn_forward.1} parent=71 // pred_region
        _
      $region96: #{gcn_forward.1} parent=71 // pred_fallthru
        _
    $region72: #{gcn_forward.1} parent=5 // pred_fallthru
      _
    %p1688 = scmp.le.s32.totalorder 2, %s19
    // Predicated region
    $region97: #{gcn_forward.1} parent=5 // pred_check
      %p1689 = pneg %p1688
    $region98: #{gcn_forward.1} parent=5 // pred_check_branch
      %1691 = sbr.rel (%p1689) target = $region100
    $region99: #{gcn_forward.1} parent=5 // pred_region
      %s1692 = ssub.s32 %s19, 2
    $region100: #{gcn_forward.1} parent=5 // pred_fallthru
      _
  $region6: #{gcn_forward.1} parent=0 // loop_footer
    %s23 = sadd.s32 1, %s19
  $region7: #{gcn_forward.1} parent=0 // loop_footer_branch
    %18 = sbr.rel target = $region3
  $region8: #{gcn_forward.1} parent=0 // loop_exit
    _

</llo_original>
